<compile_context>
chip_gen: v7x
topology: tpu7x:2x2x1
jax: 0.10.0
libtpu: 0.0.40
codegen_flags: <defaults>
</compile_context>

<pallas_src>
import numpy as np
import jax
import jax.numpy as jnp
from jax.experimental import pallas as pl
from jax.experimental.pallas import tpu as pltpu

_MXU_K_THRESHOLD = 16   # below this, unrolled VPU broadcast-FMA beats a padded MXU pass
_LANE = 128
_SUBLANE = 16           # row-tile granularity (bf16-packed-layout safe)


def _round_up(a, b):
    return -(-a // b) * b


def _make_dup_kernel(k):
    """Path A: duplicated B2 = 2*pi*[B|B] (K, W) + phase row; one W-wide store."""
    def kernel(x_ref, b2_ref, phase_ref, o_ref):
        x = x_ref[...]           # (tile, K)  f32
        b2 = b2_ref[...]         # (K, W)     f32, already scaled by 2*pi
        phase = phase_ref[...]   # (1, W)     f32, [0..0, pi/2..pi/2, 0-pad]
        if k < _MXU_K_THRESHOLD:
            # Unrolled broadcast-FMA on the VPU, pairwise (tree) accumulation.
            terms = [x[:, kk:kk + 1] * b2[kk:kk + 1, :] for kk in range(k)]
            while len(terms) > 1:
                nxt = [terms[i] + terms[i + 1] for i in range(0, len(terms) - 1, 2)]
                if len(terms) % 2:
                    nxt.append(terms[-1])
                terms = nxt
            proj = terms[0]
        else:
            proj = jnp.dot(x, b2, preferred_element_type=jnp.float32)
        # cos(t) = sin(t + pi/2): reproduces the [sin | cos] concat layout with a
        # single lane-dense transcendental pass and store.
        o_ref[...] = jnp.sin(proj + phase).astype(o_ref.dtype)
    return kernel


def _make_split_kernel(m):
    """Path B (K >= threshold, M % 128 == 0): single x @ (2*pi*B) matmul, then
    the two lane-dense halves stored separately (halves MXU FLOPs & resident B)."""
    half_pi = np.float32(np.pi / 2.0)

    def kernel(x_ref, b_ref, o_ref):
        proj = jnp.dot(x_ref[...], b_ref[...], preferred_element_type=jnp.float32)
        o_ref[:, :m] = jnp.sin(proj).astype(o_ref.dtype)
        o_ref[:, m:] = jnp.sin(proj + half_pi).astype(o_ref.dtype)
    return kernel


def fourier_features(x, B, *, tile_n=1024, out_dtype=jnp.float32):
    """x: (N, in_features) f32, B: (in_features, mapping_size) f32
    -> (N, 2*mapping_size) out_dtype, laid out as [sin(2*pi*x@B) | cos(2*pi*x@B)].
    out_dtype=jnp.bfloat16 halves the dominant HBM write traffic if acceptable."""
    N, K = x.shape
    Kb, M = B.shape
    assert Kb == K, "B first dim must match x feature dim"

    x = x.astype(jnp.float32)
    B = B.astype(jnp.float32)
    two_pi = jnp.float32(2.0 * np.pi)

    # ---- choose formulation & lane-dense output width ----
    use_split = (K >= _MXU_K_THRESHOLD) and (M % _LANE == 0)
    W = 2 * M if use_split else _round_up(2 * M, _LANE)

    # ---- row tile selection ----
    # x block (tile, K) is lane-padded to (tile, >=128) in VMEM: budget with that.
    tile = int(max(_SUBLANE, min(int(tile_n), 4096)))
    tile = _round_up(tile, _SUBLANE)
    n_ceil = _round_up(max(N, 1), _SUBLANE)
    tile = min(tile, n_ceil)
    if N > 2 * tile:
        # Keep several grid steps so the ("parallel",) axis feeds both v7x TCs
        # and the pipeline stays full; never drop below 256 rows per step.
        tile = min(tile, max(256, _round_up(pl.cdiv(N, 8), _SUBLANE)))
    grid = (pl.cdiv(N, tile),)  # ragged last block: OOB reads padded, OOB writes masked

    out_itemsize = jnp.dtype(out_dtype).itemsize
    k_lane = max(_LANE, _round_up(K, _LANE))
    budget = (2 * (tile * k_lane * 4 + tile * W * out_itemsize)   # double-buffered x + out
              + 2 * (_round_up(K, 8) + 8) * W * 4                 # resident B2/phase
              + (1 << 20))                                        # margin
    vmem_limit = int(min(64 << 20, max(budget, 16 << 20)))

    if use_split:
        b_scaled = B * two_pi                                     # (K, M)
        kernel = _make_split_kernel(M)
        operands = (x, b_scaled)
        in_specs = [
            pl.BlockSpec((tile, K), lambda i: (i, 0)),
            pl.BlockSpec((K, M), lambda i: (0, 0)),
        ]
    else:
        pad = W - 2 * M
        B2 = jnp.concatenate([B, B], axis=-1) * two_pi            # (K, 2M)
        if pad:
            B2 = jnp.pad(B2, ((0, 0), (0, pad)))                  # (K, W) lane-dense
        phase_parts = [jnp.zeros((1, M), jnp.float32),
                       jnp.full((1, M), np.pi / 2.0, jnp.float32)]
        if pad:
            phase_parts.append(jnp.zeros((1, pad), jnp.float32))
        phase = jnp.concatenate(phase_parts, axis=-1)             # (1, W)
        kernel = _make_dup_kernel(K)
        operands = (x, B2, phase)
        in_specs = [
            pl.BlockSpec((tile, K), lambda i: (i, 0)),
            pl.BlockSpec((K, W), lambda i: (0, 0)),
            pl.BlockSpec((1, W), lambda i: (0, 0)),
        ]

    out = pl.pallas_call(
        kernel,
        out_shape=jax.ShapeDtypeStruct((N, W), out_dtype),
        grid_spec=pltpu.PrefetchScalarGridSpec(
            num_scalar_prefetch=0,
            grid=grid,
            in_specs=in_specs,
            out_specs=pl.BlockSpec((tile, W), lambda i: (i, 0)),
        ),
        compiler_params=pltpu.CompilerParams(
            dimension_semantics=("parallel",),
            vmem_limit_bytes=vmem_limit,
        ),
    )(*operands)

    if W != 2 * M:
        # Rare path (2M not a lane multiple): drop the padded tail columns.
        # This is an extra copy — prefer mapping_size with 2M % 128 == 0.
        out = out[:, :2 * M]
    return out


if __name__ == "__main__":
    # Module config: FourierFeatures(in_features=2, mapping_size=64, scale=1).
    in_features, mapping_size, scale = 2, 64, 1.0
    N = 130  # deliberately not tile-aligned -> exercises the ragged last block

    key = jax.random.PRNGKey(0)
    kx, kb = jax.random.split(key)
    x = jax.random.normal(kx, (N, in_features), dtype=jnp.float32)
    B = scale * jax.random.normal(kb, (in_features, mapping_size), dtype=jnp.float32)

    out = jax.block_until_ready(fourier_features(x, B))
    assert out.shape == (N, 2 * mapping_size)

    # Exact float64 reference of the PyTorch forward.
    proj = 2.0 * np.pi * (np.asarray(x, np.float64) @ np.asarray(B, np.float64))
    ref = np.concatenate([np.sin(proj), np.cos(proj)], axis=-1)
    np.testing.assert_allclose(np.asarray(out), ref, rtol=1e-4, atol=1e-4)

    # Smoke-test the MXU / split-halves path at a small, bf16-exact size.
    k2, m2, n2 = 128, 128, 72
    x2 = jax.random.normal(kx, (n2, k2), dtype=jnp.float32).astype(jnp.bfloat16).astype(jnp.float32)
    B2p = (0.1 * jax.random.normal(kb, (k2, m2), dtype=jnp.float32)).astype(jnp.bfloat16).astype(jnp.float32)
    out2 = jax.block_until_ready(fourier_features(x2, B2p))
    proj2 = 2.0 * np.pi * (np.asarray(x2, np.float64) @ np.asarray(B2p, np.float64))
    ref2 = np.concatenate([np.sin(proj2), np.cos(proj2)], axis=-1)
    np.testing.assert_allclose(np.asarray(out2), ref2, rtol=1e-3, atol=1e-3)

    print("KERNEL_OK")
</pallas_src>

<mosaic_0001>
module attributes {stable_mosaic.version = 11 : i64} {
  func.func @kernel(%arg0: i32, %arg1: memref<144x2xf32, #tpu.memory_space<vmem>>, %arg2: memref<2x128xf32, #tpu.memory_space<vmem>>, %arg3: memref<1x128xf32, #tpu.memory_space<vmem>>, %arg4: memref<144x128xf32, #tpu.memory_space<vmem>>) attributes {dimension_semantics = [#tpu.dimension_semantics<parallel>], iteration_bounds = array<i64: 1>, scalar_prefetch = 0 : i64, scratch_operands = 0 : i64, tpu.core_type = #tpu.core_type<tc>, window_params = [{transform_indices = @transform_0, window_bounds = array<i64: 144, 2>}, {pipeline_mode = #tpu.pipeline_mode<synchronous>, transform_indices = @transform_1, window_bounds = array<i64: 2, 128>}, {pipeline_mode = #tpu.pipeline_mode<synchronous>, transform_indices = @transform_2, window_bounds = array<i64: 1, 128>}, {transform_indices = @transform_3, window_bounds = array<i64: 144, 128>}]} {
    %c0 = arith.constant 0 : index
    %c0_0 = arith.constant 0 : index
    %0 = vector.load %arg1[%c0, %c0_0] : memref<144x2xf32, #tpu.memory_space<vmem>>, vector<144x2xf32>
    %c0_1 = arith.constant 0 : index
    %c0_2 = arith.constant 0 : index
    %1 = vector.load %arg2[%c0_1, %c0_2] : memref<2x128xf32, #tpu.memory_space<vmem>>, vector<2x128xf32>
    %c0_3 = arith.constant 0 : index
    %c0_4 = arith.constant 0 : index
    %2 = vector.load %arg3[%c0_3, %c0_4] : memref<1x128xf32, #tpu.memory_space<vmem>>, vector<1x128xf32>
    %3 = vector.extract_strided_slice %0 {offsets = [0, 0], sizes = [144, 1], strides = [1, 1]} : vector<144x2xf32> to vector<144x1xf32>
    %4 = vector.extract_strided_slice %1 {offsets = [0, 0], sizes = [1, 128], strides = [1, 1]} : vector<2x128xf32> to vector<1x128xf32>
    %5 = vector.broadcast %3 : vector<144x1xf32> to vector<144x128xf32>
    %6 = vector.broadcast %4 : vector<1x128xf32> to vector<144x128xf32>
    %7 = arith.mulf %5, %6 : vector<144x128xf32>
    %8 = vector.extract_strided_slice %0 {offsets = [0, 1], sizes = [144, 1], strides = [1, 1]} : vector<144x2xf32> to vector<144x1xf32>
    %9 = vector.extract_strided_slice %1 {offsets = [1, 0], sizes = [1, 128], strides = [1, 1]} : vector<2x128xf32> to vector<1x128xf32>
    %10 = vector.broadcast %8 : vector<144x1xf32> to vector<144x128xf32>
    %11 = vector.broadcast %9 : vector<1x128xf32> to vector<144x128xf32>
    %12 = arith.mulf %10, %11 : vector<144x128xf32>
    %13 = arith.addf %7, %12 : vector<144x128xf32>
    %14 = vector.broadcast %2 : vector<1x128xf32> to vector<144x128xf32>
    %15 = arith.addf %13, %14 : vector<144x128xf32>
    %16 = math.sin %15 : vector<144x128xf32>
    %c0_5 = arith.constant 0 : index
    %c0_6 = arith.constant 0 : index
    %17 = vector.load %arg4[%c0_5, %c0_6] : memref<144x128xf32, #tpu.memory_space<vmem>>, vector<144x128xf32>
    tpu.vector_store %arg4[%c0_5, %c0_6], %16 {strides = array<i32>} : memref<144x128xf32, #tpu.memory_space<vmem>>, vector<144x128xf32>,
    return
  }
  func.func @transform_0(%arg0: i32) -> (i32, i32) {
    %c0_i32 = arith.constant 0 : i32
    %c0_i32_0 = arith.constant 0 : i32
    return %arg0, %c0_i32 : i32, i32
  }
  func.func @transform_1(%arg0: i32) -> (i32, i32) {
    %c0_i32 = arith.constant 0 : i32
    %c0_i32_0 = arith.constant 0 : i32
    %c0_i32_1 = arith.constant 0 : i32
    return %c0_i32, %c0_i32_0 : i32, i32
  }
  func.func @transform_2(%arg0: i32) -> (i32, i32) {
    %c0_i32 = arith.constant 0 : i32
    %c0_i32_0 = arith.constant 0 : i32
    %c0_i32_1 = arith.constant 0 : i32
    return %c0_i32, %c0_i32_0 : i32, i32
  }
  func.func @transform_3(%arg0: i32) -> (i32, i32) {
    %c0_i32 = arith.constant 0 : i32
    %c0_i32_0 = arith.constant 0 : i32
    return %arg0, %c0_i32 : i32, i32
  }
}

</mosaic_0001>

<llo_original>
// kernel: tpu_custom_call.1
$region0: #{tpu_custom_call.1}
  #allocation0 [shape = 'u32[]', space=smem, size = 0x4, offset = 0x4, fixed_abs, tag = 'smem constant byte address 0x4 - core index']
  #allocation1 [shape = 'u32[144,128]{1,0:T(1,128)}', space=vmem, size = 0x12000, scoped, tag = 'internal scratch']
  %s0 = inlined_call_operand.vmem [shape: f32[130,2], index: 0, kind: input, shape index: {}]
  %s1 = inlined_call_operand.vmem [shape: f32[2,128], index: 1, kind: input, shape index: {}]
  %s2 = inlined_call_operand.vmem [shape: f32[1,128], index: 2, kind: input, shape index: {}]
  %s3 = inlined_call_operand.hbm [shape: f32[130,128], index: 3, kind: output, shape index: {}]
  %s4 = sld [smem:[#allocation0]]
  $region22: #{tpu_custom_call.1} parent=0
    _
  %s6 = ssub.s32 1, %s4
  %s7 = scalar_select 0, %s6, %s4
  $region1: #{tpu_custom_call.1} parent=0
    #allocation2 [shape = 'u8[73728]{0}', space=vmem, size = 0x12000, scoped, tag = 'output window, operand 0, single buffered']
    #allocation3 [shape = 's32[1]{0}', space=sflag, size = 0x4, scoped, tag = 'scoped memory for tpu_custom_call.1']
    %8 = vsyncpa [#allocation3], 0
    // Predicated region
    $region2: #{tpu_custom_call.1} parent=1 // pred_check
      _
    $region3: #{tpu_custom_call.1} parent=1 // pred_check_branch
      %10 = sbr.rel (0) target = $region5
    $region4: #{tpu_custom_call.1} parent=1 // pred_region
      _
    $region5: #{tpu_custom_call.1} parent=1 // pred_fallthru
      _
    // Predicated region
    $region6: #{tpu_custom_call.1} parent=1 // pred_check
      _
    $region7: #{tpu_custom_call.1} parent=1 // pred_check_branch
      %12 = sbr.rel (0) target = $region9
    $region8: #{tpu_custom_call.1} parent=1 // pred_region
      _
    $region9: #{tpu_custom_call.1} parent=1 // pred_fallthru
      _
    // Predicated region
    $region10: #{tpu_custom_call.1} parent=1 // pred_check
      _
    $region11: #{tpu_custom_call.1} parent=1 // pred_check_branch
      %14 = sbr.rel (0) target = $region13
    $region12: #{tpu_custom_call.1} parent=1 // pred_region
      _
    $region13: #{tpu_custom_call.1} parent=1 // pred_fallthru
      _
    %v15 = vld [vmem:[%s0] sm:$0xff]
    %v16 = vld [vmem:[%s0 + $0x8] sm:$0xff]
    %v17 = vld [vmem:[%s0 + $0x10] sm:$0xff]
    %v18 = vld [vmem:[%s0 + $0x18] sm:$0xff]
    %v19 = vld [vmem:[%s0 + $0x20] sm:$0xff]
    %v20 = vld [vmem:[%s0 + $0x28] sm:$0xff]
    %v21 = vld [vmem:[%s0 + $0x30] sm:$0xff]
    %v22 = vld [vmem:[%s0 + $0x38] sm:$0xff]
    %v23 = vld [vmem:[%s0 + $0x40] sm:$0xff]
    %v24 = vld [vmem:[%s0 + $0x48] sm:$0xff]
    %v25 = vld [vmem:[%s0 + $0x50] sm:$0xff]
    %v26 = vld [vmem:[%s0 + $0x58] sm:$0xff]
    %v27 = vld [vmem:[%s0 + $0x60] sm:$0xff]
    %v28 = vld [vmem:[%s0 + $0x68] sm:$0xff]
    %v29 = vld [vmem:[%s0 + $0x70] sm:$0xff]
    %v30 = vld [vmem:[%s0 + $0x78] sm:$0xff]
    %v31 = vld [vmem:[%s0 + $0x80] sm:$0xff]
    %v32 = vld [vmem:[%s0 + $0x88] sm:$0xff]
    %v33 = vld [vmem:[%s1] sm:$0x3]
    %v34 = vld [vmem:[%s2] sm:$0x1]
    %36 = vset.pattern.permute.xlu0 0
    %37 = vperm.xlu0 %36, %v15
    %v38 = vpop.permute.xlu0 %37
    %41 = vset.pattern.permute.xlu0 0
    %42 = vperm.xlu0 %41, %v16
    %v43 = vpop.permute.xlu0 %42
    %46 = vset.pattern.permute.xlu0 0
    %47 = vperm.xlu0 %46, %v17
    %v48 = vpop.permute.xlu0 %47
    %51 = vset.pattern.permute.xlu0 0
    %52 = vperm.xlu0 %51, %v18
    %v53 = vpop.permute.xlu0 %52
    %56 = vset.pattern.permute.xlu0 0
    %57 = vperm.xlu0 %56, %v19
    %v58 = vpop.permute.xlu0 %57
    %61 = vset.pattern.permute.xlu0 0
    %62 = vperm.xlu0 %61, %v20
    %v63 = vpop.permute.xlu0 %62
    %66 = vset.pattern.permute.xlu0 0
    %67 = vperm.xlu0 %66, %v21
    %v68 = vpop.permute.xlu0 %67
    %71 = vset.pattern.permute.xlu0 0
    %72 = vperm.xlu0 %71, %v22
    %v73 = vpop.permute.xlu0 %72
    %76 = vset.pattern.permute.xlu0 0
    %77 = vperm.xlu0 %76, %v23
    %v78 = vpop.permute.xlu0 %77
    %81 = vset.pattern.permute.xlu0 0
    %82 = vperm.xlu0 %81, %v24
    %v83 = vpop.permute.xlu0 %82
    %86 = vset.pattern.permute.xlu0 0
    %87 = vperm.xlu0 %86, %v25
    %v88 = vpop.permute.xlu0 %87
    %91 = vset.pattern.permute.xlu0 0
    %92 = vperm.xlu0 %91, %v26
    %v93 = vpop.permute.xlu0 %92
    %96 = vset.pattern.permute.xlu0 0
    %97 = vperm.xlu0 %96, %v27
    %v98 = vpop.permute.xlu0 %97
    %101 = vset.pattern.permute.xlu0 0
    %102 = vperm.xlu0 %101, %v28
    %v103 = vpop.permute.xlu0 %102
    %106 = vset.pattern.permute.xlu0 0
    %107 = vperm.xlu0 %106, %v29
    %v108 = vpop.permute.xlu0 %107
    %111 = vset.pattern.permute.xlu0 0
    %112 = vperm.xlu0 %111, %v30
    %v113 = vpop.permute.xlu0 %112
    %116 = vset.pattern.permute.xlu0 0
    %117 = vperm.xlu0 %116, %v31
    %v118 = vpop.permute.xlu0 %117
    %121 = vset.pattern.permute.xlu0 0
    %122 = vperm.xlu0 %121, %v32
    %v123 = vpop.permute.xlu0 %122
    %v125 = vlaneseq
    %v126 = vshrl.u32 %v125, 7
    %v127 = vsub.s32 0, %v126
    %v128 = vrot.slane %v33, %v127
    %v129 = vmul.f32 %v38, %v128
    %v130 = vmul.f32 %v43, %v128
    %v131 = vmul.f32 %v48, %v128
    %v132 = vmul.f32 %v53, %v128
    %v133 = vmul.f32 %v58, %v128
    %v134 = vmul.f32 %v63, %v128
    %v135 = vmul.f32 %v68, %v128
    %v136 = vmul.f32 %v73, %v128
    %v137 = vmul.f32 %v78, %v128
    %v138 = vmul.f32 %v83, %v128
    %v139 = vmul.f32 %v88, %v128
    %v140 = vmul.f32 %v93, %v128
    %v141 = vmul.f32 %v98, %v128
    %v142 = vmul.f32 %v103, %v128
    %v143 = vmul.f32 %v108, %v128
    %v144 = vmul.f32 %v113, %v128
    %v145 = vmul.f32 %v118, %v128
    %v146 = vmul.f32 %v123, %v128
    %147 = vset.pattern.permute.xlu0 1
    %148 = vperm.xlu0 %147, %v15
    %v149 = vpop.permute.xlu0 %148
    %151 = vset.pattern.permute.xlu0 1
    %152 = vperm.xlu0 %151, %v16
    %v153 = vpop.permute.xlu0 %152
    %155 = vset.pattern.permute.xlu0 1
    %156 = vperm.xlu0 %155, %v17
    %v157 = vpop.permute.xlu0 %156
    %159 = vset.pattern.permute.xlu0 1
    %160 = vperm.xlu0 %159, %v18
    %v161 = vpop.permute.xlu0 %160
    %163 = vset.pattern.permute.xlu0 1
    %164 = vperm.xlu0 %163, %v19
    %v165 = vpop.permute.xlu0 %164
    %167 = vset.pattern.permute.xlu0 1
    %168 = vperm.xlu0 %167, %v20
    %v169 = vpop.permute.xlu0 %168
    %171 = vset.pattern.permute.xlu0 1
    %172 = vperm.xlu0 %171, %v21
    %v173 = vpop.permute.xlu0 %172
    %175 = vset.pattern.permute.xlu0 1
    %176 = vperm.xlu0 %175, %v22
    %v177 = vpop.permute.xlu0 %176
    %179 = vset.pattern.permute.xlu0 1
    %180 = vperm.xlu0 %179, %v23
    %v181 = vpop.permute.xlu0 %180
    %183 = vset.pattern.permute.xlu0 1
    %184 = vperm.xlu0 %183, %v24
    %v185 = vpop.permute.xlu0 %184
    %187 = vset.pattern.permute.xlu0 1
    %188 = vperm.xlu0 %187, %v25
    %v189 = vpop.permute.xlu0 %188
    %191 = vset.pattern.permute.xlu0 1
    %192 = vperm.xlu0 %191, %v26
    %v193 = vpop.permute.xlu0 %192
    %195 = vset.pattern.permute.xlu0 1
    %196 = vperm.xlu0 %195, %v27
    %v197 = vpop.permute.xlu0 %196
    %199 = vset.pattern.permute.xlu0 1
    %200 = vperm.xlu0 %199, %v28
    %v201 = vpop.permute.xlu0 %200
    %203 = vset.pattern.permute.xlu0 1
    %204 = vperm.xlu0 %203, %v29
    %v205 = vpop.permute.xlu0 %204
    %207 = vset.pattern.permute.xlu0 1
    %208 = vperm.xlu0 %207, %v30
    %v209 = vpop.permute.xlu0 %208
    %211 = vset.pattern.permute.xlu0 1
    %212 = vperm.xlu0 %211, %v31
    %v213 = vpop.permute.xlu0 %212
    %215 = vset.pattern.permute.xlu0 1
    %216 = vperm.xlu0 %215, %v32
    %v217 = vpop.permute.xlu0 %216
    %v219 = vlaneseq
    %v220 = vshrl.u32 %v219, 7
    %v221 = vsub.s32 1, %v220
    %v222 = vrot.slane %v33, %v221
    %v223 = vmul.f32 %v149, %v222
    %v224 = vmul.f32 %v153, %v222
    %v225 = vmul.f32 %v157, %v222
    %v226 = vmul.f32 %v161, %v222
    %v227 = vmul.f32 %v165, %v222
    %v228 = vmul.f32 %v169, %v222
    %v229 = vmul.f32 %v173, %v222
    %v230 = vmul.f32 %v177, %v222
    %v231 = vmul.f32 %v181, %v222
    %v232 = vmul.f32 %v185, %v222
    %v233 = vmul.f32 %v189, %v222
    %v234 = vmul.f32 %v193, %v222
    %v235 = vmul.f32 %v197, %v222
    %v236 = vmul.f32 %v201, %v222
    %v237 = vmul.f32 %v205, %v222
    %v238 = vmul.f32 %v209, %v222
    %v239 = vmul.f32 %v213, %v222
    %v240 = vmul.f32 %v217, %v222
    %v241 = vadd.f32 %v129, %v223
    %v242 = vadd.f32 %v130, %v224
    %v243 = vadd.f32 %v131, %v225
    %v244 = vadd.f32 %v132, %v226
    %v245 = vadd.f32 %v133, %v227
    %v246 = vadd.f32 %v134, %v228
    %v247 = vadd.f32 %v135, %v229
    %v248 = vadd.f32 %v136, %v230
    %v249 = vadd.f32 %v137, %v231
    %v250 = vadd.f32 %v138, %v232
    %v251 = vadd.f32 %v139, %v233
    %v252 = vadd.f32 %v140, %v234
    %v253 = vadd.f32 %v141, %v235
    %v254 = vadd.f32 %v142, %v236
    %v255 = vadd.f32 %v143, %v237
    %v256 = vadd.f32 %v144, %v238
    %v257 = vadd.f32 %v145, %v239
    %v258 = vadd.f32 %v146, %v240
    %v260 = vlaneseq
    %v261 = vshrl.u32 %v260, 7
    %v262 = vsub.s32 0, %v261
    %v263 = vrot.slane %v34, %v262
    %v265 = vadd.f32 %v241, %v263
    %v266 = vadd.f32 %v242, %v263
    %v267 = vadd.f32 %v243, %v263
    %v268 = vadd.f32 %v244, %v263
    %v269 = vadd.f32 %v245, %v263
    %v270 = vadd.f32 %v246, %v263
    %v271 = vadd.f32 %v247, %v263
    %v272 = vadd.f32 %v248, %v263
    %v273 = vadd.f32 %v249, %v263
    %v274 = vadd.f32 %v250, %v263
    %v275 = vadd.f32 %v251, %v263
    %v276 = vadd.f32 %v252, %v263
    %v277 = vadd.f32 %v253, %v263
    %v278 = vadd.f32 %v254, %v263
    %v279 = vadd.f32 %v255, %v263
    %v280 = vadd.f32 %v256, %v263
    %v281 = vadd.f32 %v257, %v263
    %v282 = vadd.f32 %v258, %v263
    %v283 = vand.u32 2147483647, %v265
    %vm284 = vcmp.le.f32.partialorder %v283, 0.7853982
    %vm285 = vcmp.lt.s32.totalorder %v265, 0
    %v286 = vand.u32 %v265, 2139095040
    %v287 = vshrl.u32 %v286, 23
    %v288 = vsub.s32 %v287, 127
    %v289 = vand.u32 2147483647, %v265
    %v290 = vand.u32 %v289, 8388607
    %v291 = vor.u32 %v290, 8388608
    %v292 = vsub.s32 0, %v291
    %v293 = vadd.s32 %v288, 1
    %vm294 = vcmp.gt.s32.totalorder %v293, 0
    %v295 = vsel %vm294, %v293, 0
    %v296 = vshrl.u32 %v295, 5
    %v297 = vand.u32 %v295, 31
    %v298 = vsub.s32 32, %v297
    %v299 = vshrl.u32 683565275, %v298
    %v300 = vshll.u32 683565275, %v297
    %v301 = vshrl.u32 2475754826, %v298
    %v302 = vor.u32 %v300, %v301
    %v303 = vshll.u32 2475754826, %v297
    %v304 = vshrl.u32 2131351028, %v298
    %v305 = vor.u32 %v303, %v304
    %v306 = vshll.u32 2131351028, %v297
    %v307 = vshrl.u32 2102212464, %v298
    %v308 = vor.u32 %v306, %v307
    %v309 = vshll.u32 2102212464, %v297
    %v310 = vshrl.u32 920167782, %v298
    %v311 = vor.u32 %v309, %v310
    %v312 = vshll.u32 920167782, %v297
    %v313 = vshrl.u32 1326507024, %v298
    %v314 = vor.u32 %v312, %v313
    %vm315 = vcmp.lt.s32.totalorder %v296, 1
    %vm316 = vcmp.lt.s32.totalorder %v296, 2
    %vm317 = vcmp.lt.s32.totalorder %v296, 3
    %vm318 = vcmp.lt.s32.totalorder %v296, 4
    %v319 = vsel %vm315, %v299, %v302
    %v320 = vsel %vm318, %v308, 2102212464
    %v321 = vsel %vm317, %v305, %v320
    %v322 = vsel %vm316, %v319, %v321
    %v323 = vsel %vm315, %v302, %v305
    %v324 = vsel %vm318, %v311, 920167782
    %v325 = vsel %vm317, %v308, %v324
    %v326 = vsel %vm316, %v323, %v325
    %v327 = vsel %vm315, %v305, %v308
    %v328 = vsel %vm318, %v314, 1326507024
    %v329 = vsel %vm317, %v311, %v328
    %v330 = vsel %vm316, %v327, %v329
    %v331 = vshll.u32 %v291, 8
    %v332 = vmul.u32.u64.compose %v331, %v330
    %v333 = vextract.low.u32 %v332
    %v334 = vextract.high.u32 %v332
    %v335 = vmul.u32.u64.compose %v331, %v326
    %v336 = vextract.low.u32 %v335
    %v337 = vextract.high.u32 %v335
    %v338 = vmul.u32 %v331, %v322
    %v339 = vadd.s32 %v334, %v336
    %vm340 = vc.u32 %v334, %v336
    %v341 = vadd.s32 %v337, 1
    %v342 = vsel %vm340, %v341, %v337
    %v343 = vadd.s32 %v338, %v342
    %v344 = vadd.s32 %v343, 536870912
    %v345 = vshrl.u32 %v344, 30
    %v346 = vshll.u32 %v345, 30
    %v347 = vsub.s32 %v343, %v346
    %vm348 = vcmp.lt.s32.totalorder %v347, 0
    %v349 = vsub.s32 0, %v347
    %v350 = vsel %vm348, %v349, %v347
    %v351 = vclz %v350
    %v352 = vsub.s32 %v351, 2
    %vm353 = vcmp.gt.s32.totalorder 0, %v352
    %v354 = vsel %vm353, 0, %v352
    %v355 = vsub.s32 32, %v354
    %v356 = vshll.u32 %v347, %v354
    %v357 = vshrl.u32 %v339, %v355
    %v358 = vor.u32 %v356, %v357
    %v359 = vsub.s32 4294967266, %v354
    %v360 = vadd.s32 %v359, 127
    %v361 = vshll.u32 %v360, 23
    %v362 = vor.u32 4788187, %v361
    %v363 = vand.u32 2147483647, %v362
    %v365 = vcvt.s32.f32 %v358
    %v366 = vmul.f32 %v365, %v363
    %v367 = vxor.u32 %v366, 2147483648
    %v368 = vsel %vm285, %v367, %v366
    %v369 = vsub.s32 4, %v345
    %v370 = vsel %vm285, %v369, %v345
    %v371 = vsel %vm284, %v265, %v368
    %v372 = vsel %vm284, 0, %v370
    %v373 = vcosq.f32.pop %v371
    %v374 = vsinq.f32.pop %v371
    %vm375 = vweird.f32 %v265
    %v376 = vadd.s32 %v372, 3
    %v377 = vand.u32 %v376, 3
    %vm378 = vcmp.lt.s32.totalorder %v377, 2
    %vm379 = vcmp.eq.s32.totalorder %v377, 0
    %v380 = vxor.u32 %v374, 2147483648
    %v381 = vsel %vm379, %v373, %v380
    %vm382 = vcmp.eq.s32.totalorder %v377, 2
    %v383 = vxor.u32 %v373, 2147483648
    %v384 = vsel %vm382, %v383, %v374
    %v385 = vsel %vm378, %v381, %v384
    %v386 = vsel %vm375, nan, %v385
    %v387 = vand.u32 2147483647, %v266
    %vm388 = vcmp.le.f32.partialorder %v387, 0.7853982
    %vm389 = vcmp.lt.s32.totalorder %v266, 0
    %v390 = vand.u32 %v266, 2139095040
    %v391 = vshrl.u32 %v390, 23
    %v392 = vsub.s32 %v391, 127
    %v393 = vand.u32 2147483647, %v266
    %v394 = vand.u32 %v393, 8388607
    %v395 = vor.u32 %v394, 8388608
    %v396 = vsub.s32 0, %v395
    %v397 = vadd.s32 %v392, 1
    %vm398 = vcmp.gt.s32.totalorder %v397, 0
    %v399 = vsel %vm398, %v397, 0
    %v400 = vshrl.u32 %v399, 5
    %v401 = vand.u32 %v399, 31
    %v402 = vsub.s32 32, %v401
    %v403 = vshrl.u32 683565275, %v402
    %v404 = vshll.u32 683565275, %v401
    %v405 = vshrl.u32 2475754826, %v402
    %v406 = vor.u32 %v404, %v405
    %v407 = vshll.u32 2475754826, %v401
    %v408 = vshrl.u32 2131351028, %v402
    %v409 = vor.u32 %v407, %v408
    %v410 = vshll.u32 2131351028, %v401
    %v411 = vshrl.u32 2102212464, %v402
    %v412 = vor.u32 %v410, %v411
    %v413 = vshll.u32 2102212464, %v401
    %v414 = vshrl.u32 920167782, %v402
    %v415 = vor.u32 %v413, %v414
    %v416 = vshll.u32 920167782, %v401
    %v417 = vshrl.u32 1326507024, %v402
    %v418 = vor.u32 %v416, %v417
    %vm419 = vcmp.lt.s32.totalorder %v400, 1
    %vm420 = vcmp.lt.s32.totalorder %v400, 2
    %vm421 = vcmp.lt.s32.totalorder %v400, 3
    %vm422 = vcmp.lt.s32.totalorder %v400, 4
    %v423 = vsel %vm419, %v403, %v406
    %v424 = vsel %vm422, %v412, 2102212464
    %v425 = vsel %vm421, %v409, %v424
    %v426 = vsel %vm420, %v423, %v425
    %v427 = vsel %vm419, %v406, %v409
    %v428 = vsel %vm422, %v415, 920167782
    %v429 = vsel %vm421, %v412, %v428
    %v430 = vsel %vm420, %v427, %v429
    %v431 = vsel %vm419, %v409, %v412
    %v432 = vsel %vm422, %v418, 1326507024
    %v433 = vsel %vm421, %v415, %v432
    %v434 = vsel %vm420, %v431, %v433
    %v435 = vshll.u32 %v395, 8
    %v436 = vmul.u32.u64.compose %v435, %v434
    %v437 = vextract.low.u32 %v436
    %v438 = vextract.high.u32 %v436
    %v439 = vmul.u32.u64.compose %v435, %v430
    %v440 = vextract.low.u32 %v439
    %v441 = vextract.high.u32 %v439
    %v442 = vmul.u32 %v435, %v426
    %v443 = vadd.s32 %v438, %v440
    %vm444 = vc.u32 %v438, %v440
    %v445 = vadd.s32 %v441, 1
    %v446 = vsel %vm444, %v445, %v441
    %v447 = vadd.s32 %v442, %v446
    %v448 = vadd.s32 %v447, 536870912
    %v449 = vshrl.u32 %v448, 30
    %v450 = vshll.u32 %v449, 30
    %v451 = vsub.s32 %v447, %v450
    %vm452 = vcmp.lt.s32.totalorder %v451, 0
    %v453 = vsub.s32 0, %v451
    %v454 = vsel %vm452, %v453, %v451
    %v455 = vclz %v454
    %v456 = vsub.s32 %v455, 2
    %vm457 = vcmp.gt.s32.totalorder 0, %v456
    %v458 = vsel %vm457, 0, %v456
    %v459 = vsub.s32 32, %v458
    %v460 = vshll.u32 %v451, %v458
    %v461 = vshrl.u32 %v443, %v459
    %v462 = vor.u32 %v460, %v461
    %v463 = vsub.s32 4294967266, %v458
    %v464 = vadd.s32 %v463, 127
    %v465 = vshll.u32 %v464, 23
    %v466 = vor.u32 4788187, %v465
    %v467 = vand.u32 2147483647, %v466
    %v469 = vcvt.s32.f32 %v462
    %v470 = vmul.f32 %v469, %v467
    %v471 = vxor.u32 %v470, 2147483648
    %v472 = vsel %vm389, %v471, %v470
    %v473 = vsub.s32 4, %v449
    %v474 = vsel %vm389, %v473, %v449
    %v475 = vsel %vm388, %v266, %v472
    %v476 = vsel %vm388, 0, %v474
    %v477 = vcosq.f32.pop %v475
    %v478 = vsinq.f32.pop %v475
    %vm479 = vweird.f32 %v266
    %v480 = vadd.s32 %v476, 3
    %v481 = vand.u32 %v480, 3
    %vm482 = vcmp.lt.s32.totalorder %v481, 2
    %vm483 = vcmp.eq.s32.totalorder %v481, 0
    %v484 = vxor.u32 %v478, 2147483648
    %v485 = vsel %vm483, %v477, %v484
    %vm486 = vcmp.eq.s32.totalorder %v481, 2
    %v487 = vxor.u32 %v477, 2147483648
    %v488 = vsel %vm486, %v487, %v478
    %v489 = vsel %vm482, %v485, %v488
    %v490 = vsel %vm479, nan, %v489
    %v491 = vand.u32 2147483647, %v267
    %vm492 = vcmp.le.f32.partialorder %v491, 0.7853982
    %vm493 = vcmp.lt.s32.totalorder %v267, 0
    %v494 = vand.u32 %v267, 2139095040
    %v495 = vshrl.u32 %v494, 23
    %v496 = vsub.s32 %v495, 127
    %v497 = vand.u32 2147483647, %v267
    %v498 = vand.u32 %v497, 8388607
    %v499 = vor.u32 %v498, 8388608
    %v500 = vsub.s32 0, %v499
    %v501 = vadd.s32 %v496, 1
    %vm502 = vcmp.gt.s32.totalorder %v501, 0
    %v503 = vsel %vm502, %v501, 0
    %v504 = vshrl.u32 %v503, 5
    %v505 = vand.u32 %v503, 31
    %v506 = vsub.s32 32, %v505
    %v507 = vshrl.u32 683565275, %v506
    %v508 = vshll.u32 683565275, %v505
    %v509 = vshrl.u32 2475754826, %v506
    %v510 = vor.u32 %v508, %v509
    %v511 = vshll.u32 2475754826, %v505
    %v512 = vshrl.u32 2131351028, %v506
    %v513 = vor.u32 %v511, %v512
    %v514 = vshll.u32 2131351028, %v505
    %v515 = vshrl.u32 2102212464, %v506
    %v516 = vor.u32 %v514, %v515
    %v517 = vshll.u32 2102212464, %v505
    %v518 = vshrl.u32 920167782, %v506
    %v519 = vor.u32 %v517, %v518
    %v520 = vshll.u32 920167782, %v505
    %v521 = vshrl.u32 1326507024, %v506
    %v522 = vor.u32 %v520, %v521
    %vm523 = vcmp.lt.s32.totalorder %v504, 1
    %vm524 = vcmp.lt.s32.totalorder %v504, 2
    %vm525 = vcmp.lt.s32.totalorder %v504, 3
    %vm526 = vcmp.lt.s32.totalorder %v504, 4
    %v527 = vsel %vm523, %v507, %v510
    %v528 = vsel %vm526, %v516, 2102212464
    %v529 = vsel %vm525, %v513, %v528
    %v530 = vsel %vm524, %v527, %v529
    %v531 = vsel %vm523, %v510, %v513
    %v532 = vsel %vm526, %v519, 920167782
    %v533 = vsel %vm525, %v516, %v532
    %v534 = vsel %vm524, %v531, %v533
    %v535 = vsel %vm523, %v513, %v516
    %v536 = vsel %vm526, %v522, 1326507024
    %v537 = vsel %vm525, %v519, %v536
    %v538 = vsel %vm524, %v535, %v537
    %v539 = vshll.u32 %v499, 8
    %v540 = vmul.u32.u64.compose %v539, %v538
    %v541 = vextract.low.u32 %v540
    %v542 = vextract.high.u32 %v540
    %v543 = vmul.u32.u64.compose %v539, %v534
    %v544 = vextract.low.u32 %v543
    %v545 = vextract.high.u32 %v543
    %v546 = vmul.u32 %v539, %v530
    %v547 = vadd.s32 %v542, %v544
    %vm548 = vc.u32 %v542, %v544
    %v549 = vadd.s32 %v545, 1
    %v550 = vsel %vm548, %v549, %v545
    %v551 = vadd.s32 %v546, %v550
    %v552 = vadd.s32 %v551, 536870912
    %v553 = vshrl.u32 %v552, 30
    %v554 = vshll.u32 %v553, 30
    %v555 = vsub.s32 %v551, %v554
    %vm556 = vcmp.lt.s32.totalorder %v555, 0
    %v557 = vsub.s32 0, %v555
    %v558 = vsel %vm556, %v557, %v555
    %v559 = vclz %v558
    %v560 = vsub.s32 %v559, 2
    %vm561 = vcmp.gt.s32.totalorder 0, %v560
    %v562 = vsel %vm561, 0, %v560
    %v563 = vsub.s32 32, %v562
    %v564 = vshll.u32 %v555, %v562
    %v565 = vshrl.u32 %v547, %v563
    %v566 = vor.u32 %v564, %v565
    %v567 = vsub.s32 4294967266, %v562
    %v568 = vadd.s32 %v567, 127
    %v569 = vshll.u32 %v568, 23
    %v570 = vor.u32 4788187, %v569
    %v571 = vand.u32 2147483647, %v570
    %v573 = vcvt.s32.f32 %v566
    %v574 = vmul.f32 %v573, %v571
    %v575 = vxor.u32 %v574, 2147483648
    %v576 = vsel %vm493, %v575, %v574
    %v577 = vsub.s32 4, %v553
    %v578 = vsel %vm493, %v577, %v553
    %v579 = vsel %vm492, %v267, %v576
    %v580 = vsel %vm492, 0, %v578
    %v581 = vcosq.f32.pop %v579
    %v582 = vsinq.f32.pop %v579
    %vm583 = vweird.f32 %v267
    %v584 = vadd.s32 %v580, 3
    %v585 = vand.u32 %v584, 3
    %vm586 = vcmp.lt.s32.totalorder %v585, 2
    %vm587 = vcmp.eq.s32.totalorder %v585, 0
    %v588 = vxor.u32 %v582, 2147483648
    %v589 = vsel %vm587, %v581, %v588
    %vm590 = vcmp.eq.s32.totalorder %v585, 2
    %v591 = vxor.u32 %v581, 2147483648
    %v592 = vsel %vm590, %v591, %v582
    %v593 = vsel %vm586, %v589, %v592
    %v594 = vsel %vm583, nan, %v593
    %v595 = vand.u32 2147483647, %v268
    %vm596 = vcmp.le.f32.partialorder %v595, 0.7853982
    %vm597 = vcmp.lt.s32.totalorder %v268, 0
    %v598 = vand.u32 %v268, 2139095040
    %v599 = vshrl.u32 %v598, 23
    %v600 = vsub.s32 %v599, 127
    %v601 = vand.u32 2147483647, %v268
    %v602 = vand.u32 %v601, 8388607
    %v603 = vor.u32 %v602, 8388608
    %v604 = vsub.s32 0, %v603
    %v605 = vadd.s32 %v600, 1
    %vm606 = vcmp.gt.s32.totalorder %v605, 0
    %v607 = vsel %vm606, %v605, 0
    %v608 = vshrl.u32 %v607, 5
    %v609 = vand.u32 %v607, 31
    %v610 = vsub.s32 32, %v609
    %v611 = vshrl.u32 683565275, %v610
    %v612 = vshll.u32 683565275, %v609
    %v613 = vshrl.u32 2475754826, %v610
    %v614 = vor.u32 %v612, %v613
    %v615 = vshll.u32 2475754826, %v609
    %v616 = vshrl.u32 2131351028, %v610
    %v617 = vor.u32 %v615, %v616
    %v618 = vshll.u32 2131351028, %v609
    %v619 = vshrl.u32 2102212464, %v610
    %v620 = vor.u32 %v618, %v619
    %v621 = vshll.u32 2102212464, %v609
    %v622 = vshrl.u32 920167782, %v610
    %v623 = vor.u32 %v621, %v622
    %v624 = vshll.u32 920167782, %v609
    %v625 = vshrl.u32 1326507024, %v610
    %v626 = vor.u32 %v624, %v625
    %vm627 = vcmp.lt.s32.totalorder %v608, 1
    %vm628 = vcmp.lt.s32.totalorder %v608, 2
    %vm629 = vcmp.lt.s32.totalorder %v608, 3
    %vm630 = vcmp.lt.s32.totalorder %v608, 4
    %v631 = vsel %vm627, %v611, %v614
    %v632 = vsel %vm630, %v620, 2102212464
    %v633 = vsel %vm629, %v617, %v632
    %v634 = vsel %vm628, %v631, %v633
    %v635 = vsel %vm627, %v614, %v617
    %v636 = vsel %vm630, %v623, 920167782
    %v637 = vsel %vm629, %v620, %v636
    %v638 = vsel %vm628, %v635, %v637
    %v639 = vsel %vm627, %v617, %v620
    %v640 = vsel %vm630, %v626, 1326507024
    %v641 = vsel %vm629, %v623, %v640
    %v642 = vsel %vm628, %v639, %v641
    %v643 = vshll.u32 %v603, 8
    %v644 = vmul.u32.u64.compose %v643, %v642
    %v645 = vextract.low.u32 %v644
    %v646 = vextract.high.u32 %v644
    %v647 = vmul.u32.u64.compose %v643, %v638
    %v648 = vextract.low.u32 %v647
    %v649 = vextract.high.u32 %v647
    %v650 = vmul.u32 %v643, %v634
    %v651 = vadd.s32 %v646, %v648
    %vm652 = vc.u32 %v646, %v648
    %v653 = vadd.s32 %v649, 1
    %v654 = vsel %vm652, %v653, %v649
    %v655 = vadd.s32 %v650, %v654
    %v656 = vadd.s32 %v655, 536870912
    %v657 = vshrl.u32 %v656, 30
    %v658 = vshll.u32 %v657, 30
    %v659 = vsub.s32 %v655, %v658
    %vm660 = vcmp.lt.s32.totalorder %v659, 0
    %v661 = vsub.s32 0, %v659
    %v662 = vsel %vm660, %v661, %v659
    %v663 = vclz %v662
    %v664 = vsub.s32 %v663, 2
    %vm665 = vcmp.gt.s32.totalorder 0, %v664
    %v666 = vsel %vm665, 0, %v664
    %v667 = vsub.s32 32, %v666
    %v668 = vshll.u32 %v659, %v666
    %v669 = vshrl.u32 %v651, %v667
    %v670 = vor.u32 %v668, %v669
    %v671 = vsub.s32 4294967266, %v666
    %v672 = vadd.s32 %v671, 127
    %v673 = vshll.u32 %v672, 23
    %v674 = vor.u32 4788187, %v673
    %v675 = vand.u32 2147483647, %v674
    %v677 = vcvt.s32.f32 %v670
    %v678 = vmul.f32 %v677, %v675
    %v679 = vxor.u32 %v678, 2147483648
    %v680 = vsel %vm597, %v679, %v678
    %v681 = vsub.s32 4, %v657
    %v682 = vsel %vm597, %v681, %v657
    %v683 = vsel %vm596, %v268, %v680
    %v684 = vsel %vm596, 0, %v682
    %v685 = vcosq.f32.pop %v683
    %v686 = vsinq.f32.pop %v683
    %vm687 = vweird.f32 %v268
    %v688 = vadd.s32 %v684, 3
    %v689 = vand.u32 %v688, 3
    %vm690 = vcmp.lt.s32.totalorder %v689, 2
    %vm691 = vcmp.eq.s32.totalorder %v689, 0
    %v692 = vxor.u32 %v686, 2147483648
    %v693 = vsel %vm691, %v685, %v692
    %vm694 = vcmp.eq.s32.totalorder %v689, 2
    %v695 = vxor.u32 %v685, 2147483648
    %v696 = vsel %vm694, %v695, %v686
    %v697 = vsel %vm690, %v693, %v696
    %v698 = vsel %vm687, nan, %v697
    %v699 = vand.u32 2147483647, %v269
    %vm700 = vcmp.le.f32.partialorder %v699, 0.7853982
    %vm701 = vcmp.lt.s32.totalorder %v269, 0
    %v702 = vand.u32 %v269, 2139095040
    %v703 = vshrl.u32 %v702, 23
    %v704 = vsub.s32 %v703, 127
    %v705 = vand.u32 2147483647, %v269
    %v706 = vand.u32 %v705, 8388607
    %v707 = vor.u32 %v706, 8388608
    %v708 = vsub.s32 0, %v707
    %v709 = vadd.s32 %v704, 1
    %vm710 = vcmp.gt.s32.totalorder %v709, 0
    %v711 = vsel %vm710, %v709, 0
    %v712 = vshrl.u32 %v711, 5
    %v713 = vand.u32 %v711, 31
    %v714 = vsub.s32 32, %v713
    %v715 = vshrl.u32 683565275, %v714
    %v716 = vshll.u32 683565275, %v713
    %v717 = vshrl.u32 2475754826, %v714
    %v718 = vor.u32 %v716, %v717
    %v719 = vshll.u32 2475754826, %v713
    %v720 = vshrl.u32 2131351028, %v714
    %v721 = vor.u32 %v719, %v720
    %v722 = vshll.u32 2131351028, %v713
    %v723 = vshrl.u32 2102212464, %v714
    %v724 = vor.u32 %v722, %v723
    %v725 = vshll.u32 2102212464, %v713
    %v726 = vshrl.u32 920167782, %v714
    %v727 = vor.u32 %v725, %v726
    %v728 = vshll.u32 920167782, %v713
    %v729 = vshrl.u32 1326507024, %v714
    %v730 = vor.u32 %v728, %v729
    %vm731 = vcmp.lt.s32.totalorder %v712, 1
    %vm732 = vcmp.lt.s32.totalorder %v712, 2
    %vm733 = vcmp.lt.s32.totalorder %v712, 3
    %vm734 = vcmp.lt.s32.totalorder %v712, 4
    %v735 = vsel %vm731, %v715, %v718
    %v736 = vsel %vm734, %v724, 2102212464
    %v737 = vsel %vm733, %v721, %v736
    %v738 = vsel %vm732, %v735, %v737
    %v739 = vsel %vm731, %v718, %v721
    %v740 = vsel %vm734, %v727, 920167782
    %v741 = vsel %vm733, %v724, %v740
    %v742 = vsel %vm732, %v739, %v741
    %v743 = vsel %vm731, %v721, %v724
    %v744 = vsel %vm734, %v730, 1326507024
    %v745 = vsel %vm733, %v727, %v744
    %v746 = vsel %vm732, %v743, %v745
    %v747 = vshll.u32 %v707, 8
    %v748 = vmul.u32.u64.compose %v747, %v746
    %v749 = vextract.low.u32 %v748
    %v750 = vextract.high.u32 %v748
    %v751 = vmul.u32.u64.compose %v747, %v742
    %v752 = vextract.low.u32 %v751
    %v753 = vextract.high.u32 %v751
    %v754 = vmul.u32 %v747, %v738
    %v755 = vadd.s32 %v750, %v752
    %vm756 = vc.u32 %v750, %v752
    %v757 = vadd.s32 %v753, 1
    %v758 = vsel %vm756, %v757, %v753
    %v759 = vadd.s32 %v754, %v758
    %v760 = vadd.s32 %v759, 536870912
    %v761 = vshrl.u32 %v760, 30
    %v762 = vshll.u32 %v761, 30
    %v763 = vsub.s32 %v759, %v762
    %vm764 = vcmp.lt.s32.totalorder %v763, 0
    %v765 = vsub.s32 0, %v763
    %v766 = vsel %vm764, %v765, %v763
    %v767 = vclz %v766
    %v768 = vsub.s32 %v767, 2
    %vm769 = vcmp.gt.s32.totalorder 0, %v768
    %v770 = vsel %vm769, 0, %v768
    %v771 = vsub.s32 32, %v770
    %v772 = vshll.u32 %v763, %v770
    %v773 = vshrl.u32 %v755, %v771
    %v774 = vor.u32 %v772, %v773
    %v775 = vsub.s32 4294967266, %v770
    %v776 = vadd.s32 %v775, 127
    %v777 = vshll.u32 %v776, 23
    %v778 = vor.u32 4788187, %v777
    %v779 = vand.u32 2147483647, %v778
    %v781 = vcvt.s32.f32 %v774
    %v782 = vmul.f32 %v781, %v779
    %v783 = vxor.u32 %v782, 2147483648
    %v784 = vsel %vm701, %v783, %v782
    %v785 = vsub.s32 4, %v761
    %v786 = vsel %vm701, %v785, %v761
    %v787 = vsel %vm700, %v269, %v784
    %v788 = vsel %vm700, 0, %v786
    %v789 = vcosq.f32.pop %v787
    %v790 = vsinq.f32.pop %v787
    %vm791 = vweird.f32 %v269
    %v792 = vadd.s32 %v788, 3
    %v793 = vand.u32 %v792, 3
    %vm794 = vcmp.lt.s32.totalorder %v793, 2
    %vm795 = vcmp.eq.s32.totalorder %v793, 0
    %v796 = vxor.u32 %v790, 2147483648
    %v797 = vsel %vm795, %v789, %v796
    %vm798 = vcmp.eq.s32.totalorder %v793, 2
    %v799 = vxor.u32 %v789, 2147483648
    %v800 = vsel %vm798, %v799, %v790
    %v801 = vsel %vm794, %v797, %v800
    %v802 = vsel %vm791, nan, %v801
    %v803 = vand.u32 2147483647, %v270
    %vm804 = vcmp.le.f32.partialorder %v803, 0.7853982
    %vm805 = vcmp.lt.s32.totalorder %v270, 0
    %v806 = vand.u32 %v270, 2139095040
    %v807 = vshrl.u32 %v806, 23
    %v808 = vsub.s32 %v807, 127
    %v809 = vand.u32 2147483647, %v270
    %v810 = vand.u32 %v809, 8388607
    %v811 = vor.u32 %v810, 8388608
    %v812 = vsub.s32 0, %v811
    %v813 = vadd.s32 %v808, 1
    %vm814 = vcmp.gt.s32.totalorder %v813, 0
    %v815 = vsel %vm814, %v813, 0
    %v816 = vshrl.u32 %v815, 5
    %v817 = vand.u32 %v815, 31
    %v818 = vsub.s32 32, %v817
    %v819 = vshrl.u32 683565275, %v818
    %v820 = vshll.u32 683565275, %v817
    %v821 = vshrl.u32 2475754826, %v818
    %v822 = vor.u32 %v820, %v821
    %v823 = vshll.u32 2475754826, %v817
    %v824 = vshrl.u32 2131351028, %v818
    %v825 = vor.u32 %v823, %v824
    %v826 = vshll.u32 2131351028, %v817
    %v827 = vshrl.u32 2102212464, %v818
    %v828 = vor.u32 %v826, %v827
    %v829 = vshll.u32 2102212464, %v817
    %v830 = vshrl.u32 920167782, %v818
    %v831 = vor.u32 %v829, %v830
    %v832 = vshll.u32 920167782, %v817
    %v833 = vshrl.u32 1326507024, %v818
    %v834 = vor.u32 %v832, %v833
    %vm835 = vcmp.lt.s32.totalorder %v816, 1
    %vm836 = vcmp.lt.s32.totalorder %v816, 2
    %vm837 = vcmp.lt.s32.totalorder %v816, 3
    %vm838 = vcmp.lt.s32.totalorder %v816, 4
    %v839 = vsel %vm835, %v819, %v822
    %v840 = vsel %vm838, %v828, 2102212464
    %v841 = vsel %vm837, %v825, %v840
    %v842 = vsel %vm836, %v839, %v841
    %v843 = vsel %vm835, %v822, %v825
    %v844 = vsel %vm838, %v831, 920167782
    %v845 = vsel %vm837, %v828, %v844
    %v846 = vsel %vm836, %v843, %v845
    %v847 = vsel %vm835, %v825, %v828
    %v848 = vsel %vm838, %v834, 1326507024
    %v849 = vsel %vm837, %v831, %v848
    %v850 = vsel %vm836, %v847, %v849
    %v851 = vshll.u32 %v811, 8
    %v852 = vmul.u32.u64.compose %v851, %v850
    %v853 = vextract.low.u32 %v852
    %v854 = vextract.high.u32 %v852
    %v855 = vmul.u32.u64.compose %v851, %v846
    %v856 = vextract.low.u32 %v855
    %v857 = vextract.high.u32 %v855
    %v858 = vmul.u32 %v851, %v842
    %v859 = vadd.s32 %v854, %v856
    %vm860 = vc.u32 %v854, %v856
    %v861 = vadd.s32 %v857, 1
    %v862 = vsel %vm860, %v861, %v857
    %v863 = vadd.s32 %v858, %v862
    %v864 = vadd.s32 %v863, 536870912
    %v865 = vshrl.u32 %v864, 30
    %v866 = vshll.u32 %v865, 30
    %v867 = vsub.s32 %v863, %v866
    %vm868 = vcmp.lt.s32.totalorder %v867, 0
    %v869 = vsub.s32 0, %v867
    %v870 = vsel %vm868, %v869, %v867
    %v871 = vclz %v870
    %v872 = vsub.s32 %v871, 2
    %vm873 = vcmp.gt.s32.totalorder 0, %v872
    %v874 = vsel %vm873, 0, %v872
    %v875 = vsub.s32 32, %v874
    %v876 = vshll.u32 %v867, %v874
    %v877 = vshrl.u32 %v859, %v875
    %v878 = vor.u32 %v876, %v877
    %v879 = vsub.s32 4294967266, %v874
    %v880 = vadd.s32 %v879, 127
    %v881 = vshll.u32 %v880, 23
    %v882 = vor.u32 4788187, %v881
    %v883 = vand.u32 2147483647, %v882
    %v885 = vcvt.s32.f32 %v878
    %v886 = vmul.f32 %v885, %v883
    %v887 = vxor.u32 %v886, 2147483648
    %v888 = vsel %vm805, %v887, %v886
    %v889 = vsub.s32 4, %v865
    %v890 = vsel %vm805, %v889, %v865
    %v891 = vsel %vm804, %v270, %v888
    %v892 = vsel %vm804, 0, %v890
    %v893 = vcosq.f32.pop %v891
    %v894 = vsinq.f32.pop %v891
    %vm895 = vweird.f32 %v270
    %v896 = vadd.s32 %v892, 3
    %v897 = vand.u32 %v896, 3
    %vm898 = vcmp.lt.s32.totalorder %v897, 2
    %vm899 = vcmp.eq.s32.totalorder %v897, 0
    %v900 = vxor.u32 %v894, 2147483648
    %v901 = vsel %vm899, %v893, %v900
    %vm902 = vcmp.eq.s32.totalorder %v897, 2
    %v903 = vxor.u32 %v893, 2147483648
    %v904 = vsel %vm902, %v903, %v894
    %v905 = vsel %vm898, %v901, %v904
    %v906 = vsel %vm895, nan, %v905
    %v907 = vand.u32 2147483647, %v271
    %vm908 = vcmp.le.f32.partialorder %v907, 0.7853982
    %vm909 = vcmp.lt.s32.totalorder %v271, 0
    %v910 = vand.u32 %v271, 2139095040
    %v911 = vshrl.u32 %v910, 23
    %v912 = vsub.s32 %v911, 127
    %v913 = vand.u32 2147483647, %v271
    %v914 = vand.u32 %v913, 8388607
    %v915 = vor.u32 %v914, 8388608
    %v916 = vsub.s32 0, %v915
    %v917 = vadd.s32 %v912, 1
    %vm918 = vcmp.gt.s32.totalorder %v917, 0
    %v919 = vsel %vm918, %v917, 0
    %v920 = vshrl.u32 %v919, 5
    %v921 = vand.u32 %v919, 31
    %v922 = vsub.s32 32, %v921
    %v923 = vshrl.u32 683565275, %v922
    %v924 = vshll.u32 683565275, %v921
    %v925 = vshrl.u32 2475754826, %v922
    %v926 = vor.u32 %v924, %v925
    %v927 = vshll.u32 2475754826, %v921
    %v928 = vshrl.u32 2131351028, %v922
    %v929 = vor.u32 %v927, %v928
    %v930 = vshll.u32 2131351028, %v921
    %v931 = vshrl.u32 2102212464, %v922
    %v932 = vor.u32 %v930, %v931
    %v933 = vshll.u32 2102212464, %v921
    %v934 = vshrl.u32 920167782, %v922
    %v935 = vor.u32 %v933, %v934
    %v936 = vshll.u32 920167782, %v921
    %v937 = vshrl.u32 1326507024, %v922
    %v938 = vor.u32 %v936, %v937
    %vm939 = vcmp.lt.s32.totalorder %v920, 1
    %vm940 = vcmp.lt.s32.totalorder %v920, 2
    %vm941 = vcmp.lt.s32.totalorder %v920, 3
    %vm942 = vcmp.lt.s32.totalorder %v920, 4
    %v943 = vsel %vm939, %v923, %v926
    %v944 = vsel %vm942, %v932, 2102212464
    %v945 = vsel %vm941, %v929, %v944
    %v946 = vsel %vm940, %v943, %v945
    %v947 = vsel %vm939, %v926, %v929
    %v948 = vsel %vm942, %v935, 920167782
    %v949 = vsel %vm941, %v932, %v948
    %v950 = vsel %vm940, %v947, %v949
    %v951 = vsel %vm939, %v929, %v932
    %v952 = vsel %vm942, %v938, 1326507024
    %v953 = vsel %vm941, %v935, %v952
    %v954 = vsel %vm940, %v951, %v953
    %v955 = vshll.u32 %v915, 8
    %v956 = vmul.u32.u64.compose %v955, %v954
    %v957 = vextract.low.u32 %v956
    %v958 = vextract.high.u32 %v956
    %v959 = vmul.u32.u64.compose %v955, %v950
    %v960 = vextract.low.u32 %v959
    %v961 = vextract.high.u32 %v959
    %v962 = vmul.u32 %v955, %v946
    %v963 = vadd.s32 %v958, %v960
    %vm964 = vc.u32 %v958, %v960
    %v965 = vadd.s32 %v961, 1
    %v966 = vsel %vm964, %v965, %v961
    %v967 = vadd.s32 %v962, %v966
    %v968 = vadd.s32 %v967, 536870912
    %v969 = vshrl.u32 %v968, 30
    %v970 = vshll.u32 %v969, 30
    %v971 = vsub.s32 %v967, %v970
    %vm972 = vcmp.lt.s32.totalorder %v971, 0
    %v973 = vsub.s32 0, %v971
    %v974 = vsel %vm972, %v973, %v971
    %v975 = vclz %v974
    %v976 = vsub.s32 %v975, 2
    %vm977 = vcmp.gt.s32.totalorder 0, %v976
    %v978 = vsel %vm977, 0, %v976
    %v979 = vsub.s32 32, %v978
    %v980 = vshll.u32 %v971, %v978
    %v981 = vshrl.u32 %v963, %v979
    %v982 = vor.u32 %v980, %v981
    %v983 = vsub.s32 4294967266, %v978
    %v984 = vadd.s32 %v983, 127
    %v985 = vshll.u32 %v984, 23
    %v986 = vor.u32 4788187, %v985
    %v987 = vand.u32 2147483647, %v986
    %v989 = vcvt.s32.f32 %v982
    %v990 = vmul.f32 %v989, %v987
    %v991 = vxor.u32 %v990, 2147483648
    %v992 = vsel %vm909, %v991, %v990
    %v993 = vsub.s32 4, %v969
    %v994 = vsel %vm909, %v993, %v969
    %v995 = vsel %vm908, %v271, %v992
    %v996 = vsel %vm908, 0, %v994
    %v997 = vcosq.f32.pop %v995
    %v998 = vsinq.f32.pop %v995
    %vm999 = vweird.f32 %v271
    %v1000 = vadd.s32 %v996, 3
    %v1001 = vand.u32 %v1000, 3
    %vm1002 = vcmp.lt.s32.totalorder %v1001, 2
    %vm1003 = vcmp.eq.s32.totalorder %v1001, 0
    %v1004 = vxor.u32 %v998, 2147483648
    %v1005 = vsel %vm1003, %v997, %v1004
    %vm1006 = vcmp.eq.s32.totalorder %v1001, 2
    %v1007 = vxor.u32 %v997, 2147483648
    %v1008 = vsel %vm1006, %v1007, %v998
    %v1009 = vsel %vm1002, %v1005, %v1008
    %v1010 = vsel %vm999, nan, %v1009
    %v1011 = vand.u32 2147483647, %v272
    %vm1012 = vcmp.le.f32.partialorder %v1011, 0.7853982
    %vm1013 = vcmp.lt.s32.totalorder %v272, 0
    %v1014 = vand.u32 %v272, 2139095040
    %v1015 = vshrl.u32 %v1014, 23
    %v1016 = vsub.s32 %v1015, 127
    %v1017 = vand.u32 2147483647, %v272
    %v1018 = vand.u32 %v1017, 8388607
    %v1019 = vor.u32 %v1018, 8388608
    %v1020 = vsub.s32 0, %v1019
    %v1021 = vadd.s32 %v1016, 1
    %vm1022 = vcmp.gt.s32.totalorder %v1021, 0
    %v1023 = vsel %vm1022, %v1021, 0
    %v1024 = vshrl.u32 %v1023, 5
    %v1025 = vand.u32 %v1023, 31
    %v1026 = vsub.s32 32, %v1025
    %v1027 = vshrl.u32 683565275, %v1026
    %v1028 = vshll.u32 683565275, %v1025
    %v1029 = vshrl.u32 2475754826, %v1026
    %v1030 = vor.u32 %v1028, %v1029
    %v1031 = vshll.u32 2475754826, %v1025
    %v1032 = vshrl.u32 2131351028, %v1026
    %v1033 = vor.u32 %v1031, %v1032
    %v1034 = vshll.u32 2131351028, %v1025
    %v1035 = vshrl.u32 2102212464, %v1026
    %v1036 = vor.u32 %v1034, %v1035
    %v1037 = vshll.u32 2102212464, %v1025
    %v1038 = vshrl.u32 920167782, %v1026
    %v1039 = vor.u32 %v1037, %v1038
    %v1040 = vshll.u32 920167782, %v1025
    %v1041 = vshrl.u32 1326507024, %v1026
    %v1042 = vor.u32 %v1040, %v1041
    %vm1043 = vcmp.lt.s32.totalorder %v1024, 1
    %vm1044 = vcmp.lt.s32.totalorder %v1024, 2
    %vm1045 = vcmp.lt.s32.totalorder %v1024, 3
    %vm1046 = vcmp.lt.s32.totalorder %v1024, 4
    %v1047 = vsel %vm1043, %v1027, %v1030
    %v1048 = vsel %vm1046, %v1036, 2102212464
    %v1049 = vsel %vm1045, %v1033, %v1048
    %v1050 = vsel %vm1044, %v1047, %v1049
    %v1051 = vsel %vm1043, %v1030, %v1033
    %v1052 = vsel %vm1046, %v1039, 920167782
    %v1053 = vsel %vm1045, %v1036, %v1052
    %v1054 = vsel %vm1044, %v1051, %v1053
    %v1055 = vsel %vm1043, %v1033, %v1036
    %v1056 = vsel %vm1046, %v1042, 1326507024
    %v1057 = vsel %vm1045, %v1039, %v1056
    %v1058 = vsel %vm1044, %v1055, %v1057
    %v1059 = vshll.u32 %v1019, 8
    %v1060 = vmul.u32.u64.compose %v1059, %v1058
    %v1061 = vextract.low.u32 %v1060
    %v1062 = vextract.high.u32 %v1060
    %v1063 = vmul.u32.u64.compose %v1059, %v1054
    %v1064 = vextract.low.u32 %v1063
    %v1065 = vextract.high.u32 %v1063
    %v1066 = vmul.u32 %v1059, %v1050
    %v1067 = vadd.s32 %v1062, %v1064
    %vm1068 = vc.u32 %v1062, %v1064
    %v1069 = vadd.s32 %v1065, 1
    %v1070 = vsel %vm1068, %v1069, %v1065
    %v1071 = vadd.s32 %v1066, %v1070
    %v1072 = vadd.s32 %v1071, 536870912
    %v1073 = vshrl.u32 %v1072, 30
    %v1074 = vshll.u32 %v1073, 30
    %v1075 = vsub.s32 %v1071, %v1074
    %vm1076 = vcmp.lt.s32.totalorder %v1075, 0
    %v1077 = vsub.s32 0, %v1075
    %v1078 = vsel %vm1076, %v1077, %v1075
    %v1079 = vclz %v1078
    %v1080 = vsub.s32 %v1079, 2
    %vm1081 = vcmp.gt.s32.totalorder 0, %v1080
    %v1082 = vsel %vm1081, 0, %v1080
    %v1083 = vsub.s32 32, %v1082
    %v1084 = vshll.u32 %v1075, %v1082
    %v1085 = vshrl.u32 %v1067, %v1083
    %v1086 = vor.u32 %v1084, %v1085
    %v1087 = vsub.s32 4294967266, %v1082
    %v1088 = vadd.s32 %v1087, 127
    %v1089 = vshll.u32 %v1088, 23
    %v1090 = vor.u32 4788187, %v1089
    %v1091 = vand.u32 2147483647, %v1090
    %v1093 = vcvt.s32.f32 %v1086
    %v1094 = vmul.f32 %v1093, %v1091
    %v1095 = vxor.u32 %v1094, 2147483648
    %v1096 = vsel %vm1013, %v1095, %v1094
    %v1097 = vsub.s32 4, %v1073
    %v1098 = vsel %vm1013, %v1097, %v1073
    %v1099 = vsel %vm1012, %v272, %v1096
    %v1100 = vsel %vm1012, 0, %v1098
    %v1101 = vcosq.f32.pop %v1099
    %v1102 = vsinq.f32.pop %v1099
    %vm1103 = vweird.f32 %v272
    %v1104 = vadd.s32 %v1100, 3
    %v1105 = vand.u32 %v1104, 3
    %vm1106 = vcmp.lt.s32.totalorder %v1105, 2
    %vm1107 = vcmp.eq.s32.totalorder %v1105, 0
    %v1108 = vxor.u32 %v1102, 2147483648
    %v1109 = vsel %vm1107, %v1101, %v1108
    %vm1110 = vcmp.eq.s32.totalorder %v1105, 2
    %v1111 = vxor.u32 %v1101, 2147483648
    %v1112 = vsel %vm1110, %v1111, %v1102
    %v1113 = vsel %vm1106, %v1109, %v1112
    %v1114 = vsel %vm1103, nan, %v1113
    %v1115 = vand.u32 2147483647, %v273
    %vm1116 = vcmp.le.f32.partialorder %v1115, 0.7853982
    %vm1117 = vcmp.lt.s32.totalorder %v273, 0
    %v1118 = vand.u32 %v273, 2139095040
    %v1119 = vshrl.u32 %v1118, 23
    %v1120 = vsub.s32 %v1119, 127
    %v1121 = vand.u32 2147483647, %v273
    %v1122 = vand.u32 %v1121, 8388607
    %v1123 = vor.u32 %v1122, 8388608
    %v1124 = vsub.s32 0, %v1123
    %v1125 = vadd.s32 %v1120, 1
    %vm1126 = vcmp.gt.s32.totalorder %v1125, 0
    %v1127 = vsel %vm1126, %v1125, 0
    %v1128 = vshrl.u32 %v1127, 5
    %v1129 = vand.u32 %v1127, 31
    %v1130 = vsub.s32 32, %v1129
    %v1131 = vshrl.u32 683565275, %v1130
    %v1132 = vshll.u32 683565275, %v1129
    %v1133 = vshrl.u32 2475754826, %v1130
    %v1134 = vor.u32 %v1132, %v1133
    %v1135 = vshll.u32 2475754826, %v1129
    %v1136 = vshrl.u32 2131351028, %v1130
    %v1137 = vor.u32 %v1135, %v1136
    %v1138 = vshll.u32 2131351028, %v1129
    %v1139 = vshrl.u32 2102212464, %v1130
    %v1140 = vor.u32 %v1138, %v1139
    %v1141 = vshll.u32 2102212464, %v1129
    %v1142 = vshrl.u32 920167782, %v1130
    %v1143 = vor.u32 %v1141, %v1142
    %v1144 = vshll.u32 920167782, %v1129
    %v1145 = vshrl.u32 1326507024, %v1130
    %v1146 = vor.u32 %v1144, %v1145
    %vm1147 = vcmp.lt.s32.totalorder %v1128, 1
    %vm1148 = vcmp.lt.s32.totalorder %v1128, 2
    %vm1149 = vcmp.lt.s32.totalorder %v1128, 3
    %vm1150 = vcmp.lt.s32.totalorder %v1128, 4
    %v1151 = vsel %vm1147, %v1131, %v1134
    %v1152 = vsel %vm1150, %v1140, 2102212464
    %v1153 = vsel %vm1149, %v1137, %v1152
    %v1154 = vsel %vm1148, %v1151, %v1153
    %v1155 = vsel %vm1147, %v1134, %v1137
    %v1156 = vsel %vm1150, %v1143, 920167782
    %v1157 = vsel %vm1149, %v1140, %v1156
    %v1158 = vsel %vm1148, %v1155, %v1157
    %v1159 = vsel %vm1147, %v1137, %v1140
    %v1160 = vsel %vm1150, %v1146, 1326507024
    %v1161 = vsel %vm1149, %v1143, %v1160
    %v1162 = vsel %vm1148, %v1159, %v1161
    %v1163 = vshll.u32 %v1123, 8
    %v1164 = vmul.u32.u64.compose %v1163, %v1162
    %v1165 = vextract.low.u32 %v1164
    %v1166 = vextract.high.u32 %v1164
    %v1167 = vmul.u32.u64.compose %v1163, %v1158
    %v1168 = vextract.low.u32 %v1167
    %v1169 = vextract.high.u32 %v1167
    %v1170 = vmul.u32 %v1163, %v1154
    %v1171 = vadd.s32 %v1166, %v1168
    %vm1172 = vc.u32 %v1166, %v1168
    %v1173 = vadd.s32 %v1169, 1
    %v1174 = vsel %vm1172, %v1173, %v1169
    %v1175 = vadd.s32 %v1170, %v1174
    %v1176 = vadd.s32 %v1175, 536870912
    %v1177 = vshrl.u32 %v1176, 30
    %v1178 = vshll.u32 %v1177, 30
    %v1179 = vsub.s32 %v1175, %v1178
    %vm1180 = vcmp.lt.s32.totalorder %v1179, 0
    %v1181 = vsub.s32 0, %v1179
    %v1182 = vsel %vm1180, %v1181, %v1179
    %v1183 = vclz %v1182
    %v1184 = vsub.s32 %v1183, 2
    %vm1185 = vcmp.gt.s32.totalorder 0, %v1184
    %v1186 = vsel %vm1185, 0, %v1184
    %v1187 = vsub.s32 32, %v1186
    %v1188 = vshll.u32 %v1179, %v1186
    %v1189 = vshrl.u32 %v1171, %v1187
    %v1190 = vor.u32 %v1188, %v1189
    %v1191 = vsub.s32 4294967266, %v1186
    %v1192 = vadd.s32 %v1191, 127
    %v1193 = vshll.u32 %v1192, 23
    %v1194 = vor.u32 4788187, %v1193
    %v1195 = vand.u32 2147483647, %v1194
    %v1197 = vcvt.s32.f32 %v1190
    %v1198 = vmul.f32 %v1197, %v1195
    %v1199 = vxor.u32 %v1198, 2147483648
    %v1200 = vsel %vm1117, %v1199, %v1198
    %v1201 = vsub.s32 4, %v1177
    %v1202 = vsel %vm1117, %v1201, %v1177
    %v1203 = vsel %vm1116, %v273, %v1200
    %v1204 = vsel %vm1116, 0, %v1202
    %v1205 = vcosq.f32.pop %v1203
    %v1206 = vsinq.f32.pop %v1203
    %vm1207 = vweird.f32 %v273
    %v1208 = vadd.s32 %v1204, 3
    %v1209 = vand.u32 %v1208, 3
    %vm1210 = vcmp.lt.s32.totalorder %v1209, 2
    %vm1211 = vcmp.eq.s32.totalorder %v1209, 0
    %v1212 = vxor.u32 %v1206, 2147483648
    %v1213 = vsel %vm1211, %v1205, %v1212
    %vm1214 = vcmp.eq.s32.totalorder %v1209, 2
    %v1215 = vxor.u32 %v1205, 2147483648
    %v1216 = vsel %vm1214, %v1215, %v1206
    %v1217 = vsel %vm1210, %v1213, %v1216
    %v1218 = vsel %vm1207, nan, %v1217
    %v1219 = vand.u32 2147483647, %v274
    %vm1220 = vcmp.le.f32.partialorder %v1219, 0.7853982
    %vm1221 = vcmp.lt.s32.totalorder %v274, 0
    %v1222 = vand.u32 %v274, 2139095040
    %v1223 = vshrl.u32 %v1222, 23
    %v1224 = vsub.s32 %v1223, 127
    %v1225 = vand.u32 2147483647, %v274
    %v1226 = vand.u32 %v1225, 8388607
    %v1227 = vor.u32 %v1226, 8388608
    %v1228 = vsub.s32 0, %v1227
    %v1229 = vadd.s32 %v1224, 1
    %vm1230 = vcmp.gt.s32.totalorder %v1229, 0
    %v1231 = vsel %vm1230, %v1229, 0
    %v1232 = vshrl.u32 %v1231, 5
    %v1233 = vand.u32 %v1231, 31
    %v1234 = vsub.s32 32, %v1233
    %v1235 = vshrl.u32 683565275, %v1234
    %v1236 = vshll.u32 683565275, %v1233
    %v1237 = vshrl.u32 2475754826, %v1234
    %v1238 = vor.u32 %v1236, %v1237
    %v1239 = vshll.u32 2475754826, %v1233
    %v1240 = vshrl.u32 2131351028, %v1234
    %v1241 = vor.u32 %v1239, %v1240
    %v1242 = vshll.u32 2131351028, %v1233
    %v1243 = vshrl.u32 2102212464, %v1234
    %v1244 = vor.u32 %v1242, %v1243
    %v1245 = vshll.u32 2102212464, %v1233
    %v1246 = vshrl.u32 920167782, %v1234
    %v1247 = vor.u32 %v1245, %v1246
    %v1248 = vshll.u32 920167782, %v1233
    %v1249 = vshrl.u32 1326507024, %v1234
    %v1250 = vor.u32 %v1248, %v1249
    %vm1251 = vcmp.lt.s32.totalorder %v1232, 1
    %vm1252 = vcmp.lt.s32.totalorder %v1232, 2
    %vm1253 = vcmp.lt.s32.totalorder %v1232, 3
    %vm1254 = vcmp.lt.s32.totalorder %v1232, 4
    %v1255 = vsel %vm1251, %v1235, %v1238
    %v1256 = vsel %vm1254, %v1244, 2102212464
    %v1257 = vsel %vm1253, %v1241, %v1256
    %v1258 = vsel %vm1252, %v1255, %v1257
    %v1259 = vsel %vm1251, %v1238, %v1241
    %v1260 = vsel %vm1254, %v1247, 920167782
    %v1261 = vsel %vm1253, %v1244, %v1260
    %v1262 = vsel %vm1252, %v1259, %v1261
    %v1263 = vsel %vm1251, %v1241, %v1244
    %v1264 = vsel %vm1254, %v1250, 1326507024
    %v1265 = vsel %vm1253, %v1247, %v1264
    %v1266 = vsel %vm1252, %v1263, %v1265
    %v1267 = vshll.u32 %v1227, 8
    %v1268 = vmul.u32.u64.compose %v1267, %v1266
    %v1269 = vextract.low.u32 %v1268
    %v1270 = vextract.high.u32 %v1268
    %v1271 = vmul.u32.u64.compose %v1267, %v1262
    %v1272 = vextract.low.u32 %v1271
    %v1273 = vextract.high.u32 %v1271
    %v1274 = vmul.u32 %v1267, %v1258
    %v1275 = vadd.s32 %v1270, %v1272
    %vm1276 = vc.u32 %v1270, %v1272
    %v1277 = vadd.s32 %v1273, 1
    %v1278 = vsel %vm1276, %v1277, %v1273
    %v1279 = vadd.s32 %v1274, %v1278
    %v1280 = vadd.s32 %v1279, 536870912
    %v1281 = vshrl.u32 %v1280, 30
    %v1282 = vshll.u32 %v1281, 30
    %v1283 = vsub.s32 %v1279, %v1282
    %vm1284 = vcmp.lt.s32.totalorder %v1283, 0
    %v1285 = vsub.s32 0, %v1283
    %v1286 = vsel %vm1284, %v1285, %v1283
    %v1287 = vclz %v1286
    %v1288 = vsub.s32 %v1287, 2
    %vm1289 = vcmp.gt.s32.totalorder 0, %v1288
    %v1290 = vsel %vm1289, 0, %v1288
    %v1291 = vsub.s32 32, %v1290
    %v1292 = vshll.u32 %v1283, %v1290
    %v1293 = vshrl.u32 %v1275, %v1291
    %v1294 = vor.u32 %v1292, %v1293
    %v1295 = vsub.s32 4294967266, %v1290
    %v1296 = vadd.s32 %v1295, 127
    %v1297 = vshll.u32 %v1296, 23
    %v1298 = vor.u32 4788187, %v1297
    %v1299 = vand.u32 2147483647, %v1298
    %v1301 = vcvt.s32.f32 %v1294
    %v1302 = vmul.f32 %v1301, %v1299
    %v1303 = vxor.u32 %v1302, 2147483648
    %v1304 = vsel %vm1221, %v1303, %v1302
    %v1305 = vsub.s32 4, %v1281
    %v1306 = vsel %vm1221, %v1305, %v1281
    %v1307 = vsel %vm1220, %v274, %v1304
    %v1308 = vsel %vm1220, 0, %v1306
    %v1309 = vcosq.f32.pop %v1307
    %v1310 = vsinq.f32.pop %v1307
    %vm1311 = vweird.f32 %v274
    %v1312 = vadd.s32 %v1308, 3
    %v1313 = vand.u32 %v1312, 3
    %vm1314 = vcmp.lt.s32.totalorder %v1313, 2
    %vm1315 = vcmp.eq.s32.totalorder %v1313, 0
    %v1316 = vxor.u32 %v1310, 2147483648
    %v1317 = vsel %vm1315, %v1309, %v1316
    %vm1318 = vcmp.eq.s32.totalorder %v1313, 2
    %v1319 = vxor.u32 %v1309, 2147483648
    %v1320 = vsel %vm1318, %v1319, %v1310
    %v1321 = vsel %vm1314, %v1317, %v1320
    %v1322 = vsel %vm1311, nan, %v1321
    %v1323 = vand.u32 2147483647, %v275
    %vm1324 = vcmp.le.f32.partialorder %v1323, 0.7853982
    %vm1325 = vcmp.lt.s32.totalorder %v275, 0
    %v1326 = vand.u32 %v275, 2139095040
    %v1327 = vshrl.u32 %v1326, 23
    %v1328 = vsub.s32 %v1327, 127
    %v1329 = vand.u32 2147483647, %v275
    %v1330 = vand.u32 %v1329, 8388607
    %v1331 = vor.u32 %v1330, 8388608
    %v1332 = vsub.s32 0, %v1331
    %v1333 = vadd.s32 %v1328, 1
    %vm1334 = vcmp.gt.s32.totalorder %v1333, 0
    %v1335 = vsel %vm1334, %v1333, 0
    %v1336 = vshrl.u32 %v1335, 5
    %v1337 = vand.u32 %v1335, 31
    %v1338 = vsub.s32 32, %v1337
    %v1339 = vshrl.u32 683565275, %v1338
    %v1340 = vshll.u32 683565275, %v1337
    %v1341 = vshrl.u32 2475754826, %v1338
    %v1342 = vor.u32 %v1340, %v1341
    %v1343 = vshll.u32 2475754826, %v1337
    %v1344 = vshrl.u32 2131351028, %v1338
    %v1345 = vor.u32 %v1343, %v1344
    %v1346 = vshll.u32 2131351028, %v1337
    %v1347 = vshrl.u32 2102212464, %v1338
    %v1348 = vor.u32 %v1346, %v1347
    %v1349 = vshll.u32 2102212464, %v1337
    %v1350 = vshrl.u32 920167782, %v1338
    %v1351 = vor.u32 %v1349, %v1350
    %v1352 = vshll.u32 920167782, %v1337
    %v1353 = vshrl.u32 1326507024, %v1338
    %v1354 = vor.u32 %v1352, %v1353
    %vm1355 = vcmp.lt.s32.totalorder %v1336, 1
    %vm1356 = vcmp.lt.s32.totalorder %v1336, 2
    %vm1357 = vcmp.lt.s32.totalorder %v1336, 3
    %vm1358 = vcmp.lt.s32.totalorder %v1336, 4
    %v1359 = vsel %vm1355, %v1339, %v1342
    %v1360 = vsel %vm1358, %v1348, 2102212464
    %v1361 = vsel %vm1357, %v1345, %v1360
    %v1362 = vsel %vm1356, %v1359, %v1361
    %v1363 = vsel %vm1355, %v1342, %v1345
    %v1364 = vsel %vm1358, %v1351, 920167782
    %v1365 = vsel %vm1357, %v1348, %v1364
    %v1366 = vsel %vm1356, %v1363, %v1365
    %v1367 = vsel %vm1355, %v1345, %v1348
    %v1368 = vsel %vm1358, %v1354, 1326507024
    %v1369 = vsel %vm1357, %v1351, %v1368
    %v1370 = vsel %vm1356, %v1367, %v1369
    %v1371 = vshll.u32 %v1331, 8
    %v1372 = vmul.u32.u64.compose %v1371, %v1370
    %v1373 = vextract.low.u32 %v1372
    %v1374 = vextract.high.u32 %v1372
    %v1375 = vmul.u32.u64.compose %v1371, %v1366
    %v1376 = vextract.low.u32 %v1375
    %v1377 = vextract.high.u32 %v1375
    %v1378 = vmul.u32 %v1371, %v1362
    %v1379 = vadd.s32 %v1374, %v1376
    %vm1380 = vc.u32 %v1374, %v1376
    %v1381 = vadd.s32 %v1377, 1
    %v1382 = vsel %vm1380, %v1381, %v1377
    %v1383 = vadd.s32 %v1378, %v1382
    %v1384 = vadd.s32 %v1383, 536870912
    %v1385 = vshrl.u32 %v1384, 30
    %v1386 = vshll.u32 %v1385, 30
    %v1387 = vsub.s32 %v1383, %v1386
    %vm1388 = vcmp.lt.s32.totalorder %v1387, 0
    %v1389 = vsub.s32 0, %v1387
    %v1390 = vsel %vm1388, %v1389, %v1387
    %v1391 = vclz %v1390
    %v1392 = vsub.s32 %v1391, 2
    %vm1393 = vcmp.gt.s32.totalorder 0, %v1392
    %v1394 = vsel %vm1393, 0, %v1392
    %v1395 = vsub.s32 32, %v1394
    %v1396 = vshll.u32 %v1387, %v1394
    %v1397 = vshrl.u32 %v1379, %v1395
    %v1398 = vor.u32 %v1396, %v1397
    %v1399 = vsub.s32 4294967266, %v1394
    %v1400 = vadd.s32 %v1399, 127
    %v1401 = vshll.u32 %v1400, 23
    %v1402 = vor.u32 4788187, %v1401
    %v1403 = vand.u32 2147483647, %v1402
    %v1405 = vcvt.s32.f32 %v1398
    %v1406 = vmul.f32 %v1405, %v1403
    %v1407 = vxor.u32 %v1406, 2147483648
    %v1408 = vsel %vm1325, %v1407, %v1406
    %v1409 = vsub.s32 4, %v1385
    %v1410 = vsel %vm1325, %v1409, %v1385
    %v1411 = vsel %vm1324, %v275, %v1408
    %v1412 = vsel %vm1324, 0, %v1410
    %v1413 = vcosq.f32.pop %v1411
    %v1414 = vsinq.f32.pop %v1411
    %vm1415 = vweird.f32 %v275
    %v1416 = vadd.s32 %v1412, 3
    %v1417 = vand.u32 %v1416, 3
    %vm1418 = vcmp.lt.s32.totalorder %v1417, 2
    %vm1419 = vcmp.eq.s32.totalorder %v1417, 0
    %v1420 = vxor.u32 %v1414, 2147483648
    %v1421 = vsel %vm1419, %v1413, %v1420
    %vm1422 = vcmp.eq.s32.totalorder %v1417, 2
    %v1423 = vxor.u32 %v1413, 2147483648
    %v1424 = vsel %vm1422, %v1423, %v1414
    %v1425 = vsel %vm1418, %v1421, %v1424
    %v1426 = vsel %vm1415, nan, %v1425
    %v1427 = vand.u32 2147483647, %v276
    %vm1428 = vcmp.le.f32.partialorder %v1427, 0.7853982
    %vm1429 = vcmp.lt.s32.totalorder %v276, 0
    %v1430 = vand.u32 %v276, 2139095040
    %v1431 = vshrl.u32 %v1430, 23
    %v1432 = vsub.s32 %v1431, 127
    %v1433 = vand.u32 2147483647, %v276
    %v1434 = vand.u32 %v1433, 8388607
    %v1435 = vor.u32 %v1434, 8388608
    %v1436 = vsub.s32 0, %v1435
    %v1437 = vadd.s32 %v1432, 1
    %vm1438 = vcmp.gt.s32.totalorder %v1437, 0
    %v1439 = vsel %vm1438, %v1437, 0
    %v1440 = vshrl.u32 %v1439, 5
    %v1441 = vand.u32 %v1439, 31
    %v1442 = vsub.s32 32, %v1441
    %v1443 = vshrl.u32 683565275, %v1442
    %v1444 = vshll.u32 683565275, %v1441
    %v1445 = vshrl.u32 2475754826, %v1442
    %v1446 = vor.u32 %v1444, %v1445
    %v1447 = vshll.u32 2475754826, %v1441
    %v1448 = vshrl.u32 2131351028, %v1442
    %v1449 = vor.u32 %v1447, %v1448
    %v1450 = vshll.u32 2131351028, %v1441
    %v1451 = vshrl.u32 2102212464, %v1442
    %v1452 = vor.u32 %v1450, %v1451
    %v1453 = vshll.u32 2102212464, %v1441
    %v1454 = vshrl.u32 920167782, %v1442
    %v1455 = vor.u32 %v1453, %v1454
    %v1456 = vshll.u32 920167782, %v1441
    %v1457 = vshrl.u32 1326507024, %v1442
    %v1458 = vor.u32 %v1456, %v1457
    %vm1459 = vcmp.lt.s32.totalorder %v1440, 1
    %vm1460 = vcmp.lt.s32.totalorder %v1440, 2
    %vm1461 = vcmp.lt.s32.totalorder %v1440, 3
    %vm1462 = vcmp.lt.s32.totalorder %v1440, 4
    %v1463 = vsel %vm1459, %v1443, %v1446
    %v1464 = vsel %vm1462, %v1452, 2102212464
    %v1465 = vsel %vm1461, %v1449, %v1464
    %v1466 = vsel %vm1460, %v1463, %v1465
    %v1467 = vsel %vm1459, %v1446, %v1449
    %v1468 = vsel %vm1462, %v1455, 920167782
    %v1469 = vsel %vm1461, %v1452, %v1468
    %v1470 = vsel %vm1460, %v1467, %v1469
    %v1471 = vsel %vm1459, %v1449, %v1452
    %v1472 = vsel %vm1462, %v1458, 1326507024
    %v1473 = vsel %vm1461, %v1455, %v1472
    %v1474 = vsel %vm1460, %v1471, %v1473
    %v1475 = vshll.u32 %v1435, 8
    %v1476 = vmul.u32.u64.compose %v1475, %v1474
    %v1477 = vextract.low.u32 %v1476
    %v1478 = vextract.high.u32 %v1476
    %v1479 = vmul.u32.u64.compose %v1475, %v1470
    %v1480 = vextract.low.u32 %v1479
    %v1481 = vextract.high.u32 %v1479
    %v1482 = vmul.u32 %v1475, %v1466
    %v1483 = vadd.s32 %v1478, %v1480
    %vm1484 = vc.u32 %v1478, %v1480
    %v1485 = vadd.s32 %v1481, 1
    %v1486 = vsel %vm1484, %v1485, %v1481
    %v1487 = vadd.s32 %v1482, %v1486
    %v1488 = vadd.s32 %v1487, 536870912
    %v1489 = vshrl.u32 %v1488, 30
    %v1490 = vshll.u32 %v1489, 30
    %v1491 = vsub.s32 %v1487, %v1490
    %vm1492 = vcmp.lt.s32.totalorder %v1491, 0
    %v1493 = vsub.s32 0, %v1491
    %v1494 = vsel %vm1492, %v1493, %v1491
    %v1495 = vclz %v1494
    %v1496 = vsub.s32 %v1495, 2
    %vm1497 = vcmp.gt.s32.totalorder 0, %v1496
    %v1498 = vsel %vm1497, 0, %v1496
    %v1499 = vsub.s32 32, %v1498
    %v1500 = vshll.u32 %v1491, %v1498
    %v1501 = vshrl.u32 %v1483, %v1499
    %v1502 = vor.u32 %v1500, %v1501
    %v1503 = vsub.s32 4294967266, %v1498
    %v1504 = vadd.s32 %v1503, 127
    %v1505 = vshll.u32 %v1504, 23
    %v1506 = vor.u32 4788187, %v1505
    %v1507 = vand.u32 2147483647, %v1506
    %v1509 = vcvt.s32.f32 %v1502
    %v1510 = vmul.f32 %v1509, %v1507
    %v1511 = vxor.u32 %v1510, 2147483648
    %v1512 = vsel %vm1429, %v1511, %v1510
    %v1513 = vsub.s32 4, %v1489
    %v1514 = vsel %vm1429, %v1513, %v1489
    %v1515 = vsel %vm1428, %v276, %v1512
    %v1516 = vsel %vm1428, 0, %v1514
    %v1517 = vcosq.f32.pop %v1515
    %v1518 = vsinq.f32.pop %v1515
    %vm1519 = vweird.f32 %v276
    %v1520 = vadd.s32 %v1516, 3
    %v1521 = vand.u32 %v1520, 3
    %vm1522 = vcmp.lt.s32.totalorder %v1521, 2
    %vm1523 = vcmp.eq.s32.totalorder %v1521, 0
    %v1524 = vxor.u32 %v1518, 2147483648
    %v1525 = vsel %vm1523, %v1517, %v1524
    %vm1526 = vcmp.eq.s32.totalorder %v1521, 2
    %v1527 = vxor.u32 %v1517, 2147483648
    %v1528 = vsel %vm1526, %v1527, %v1518
    %v1529 = vsel %vm1522, %v1525, %v1528
    %v1530 = vsel %vm1519, nan, %v1529
    %v1531 = vand.u32 2147483647, %v277
    %vm1532 = vcmp.le.f32.partialorder %v1531, 0.7853982
    %vm1533 = vcmp.lt.s32.totalorder %v277, 0
    %v1534 = vand.u32 %v277, 2139095040
    %v1535 = vshrl.u32 %v1534, 23
    %v1536 = vsub.s32 %v1535, 127
    %v1537 = vand.u32 2147483647, %v277
    %v1538 = vand.u32 %v1537, 8388607
    %v1539 = vor.u32 %v1538, 8388608
    %v1540 = vsub.s32 0, %v1539
    %v1541 = vadd.s32 %v1536, 1
    %vm1542 = vcmp.gt.s32.totalorder %v1541, 0
    %v1543 = vsel %vm1542, %v1541, 0
    %v1544 = vshrl.u32 %v1543, 5
    %v1545 = vand.u32 %v1543, 31
    %v1546 = vsub.s32 32, %v1545
    %v1547 = vshrl.u32 683565275, %v1546
    %v1548 = vshll.u32 683565275, %v1545
    %v1549 = vshrl.u32 2475754826, %v1546
    %v1550 = vor.u32 %v1548, %v1549
    %v1551 = vshll.u32 2475754826, %v1545
    %v1552 = vshrl.u32 2131351028, %v1546
    %v1553 = vor.u32 %v1551, %v1552
    %v1554 = vshll.u32 2131351028, %v1545
    %v1555 = vshrl.u32 2102212464, %v1546
    %v1556 = vor.u32 %v1554, %v1555
    %v1557 = vshll.u32 2102212464, %v1545
    %v1558 = vshrl.u32 920167782, %v1546
    %v1559 = vor.u32 %v1557, %v1558
    %v1560 = vshll.u32 920167782, %v1545
    %v1561 = vshrl.u32 1326507024, %v1546
    %v1562 = vor.u32 %v1560, %v1561
    %vm1563 = vcmp.lt.s32.totalorder %v1544, 1
    %vm1564 = vcmp.lt.s32.totalorder %v1544, 2
    %vm1565 = vcmp.lt.s32.totalorder %v1544, 3
    %vm1566 = vcmp.lt.s32.totalorder %v1544, 4
    %v1567 = vsel %vm1563, %v1547, %v1550
    %v1568 = vsel %vm1566, %v1556, 2102212464
    %v1569 = vsel %vm1565, %v1553, %v1568
    %v1570 = vsel %vm1564, %v1567, %v1569
    %v1571 = vsel %vm1563, %v1550, %v1553
    %v1572 = vsel %vm1566, %v1559, 920167782
    %v1573 = vsel %vm1565, %v1556, %v1572
    %v1574 = vsel %vm1564, %v1571, %v1573
    %v1575 = vsel %vm1563, %v1553, %v1556
    %v1576 = vsel %vm1566, %v1562, 1326507024
    %v1577 = vsel %vm1565, %v1559, %v1576
    %v1578 = vsel %vm1564, %v1575, %v1577
    %v1579 = vshll.u32 %v1539, 8
    %v1580 = vmul.u32.u64.compose %v1579, %v1578
    %v1581 = vextract.low.u32 %v1580
    %v1582 = vextract.high.u32 %v1580
    %v1583 = vmul.u32.u64.compose %v1579, %v1574
    %v1584 = vextract.low.u32 %v1583
    %v1585 = vextract.high.u32 %v1583
    %v1586 = vmul.u32 %v1579, %v1570
    %v1587 = vadd.s32 %v1582, %v1584
    %vm1588 = vc.u32 %v1582, %v1584
    %v1589 = vadd.s32 %v1585, 1
    %v1590 = vsel %vm1588, %v1589, %v1585
    %v1591 = vadd.s32 %v1586, %v1590
    %v1592 = vadd.s32 %v1591, 536870912
    %v1593 = vshrl.u32 %v1592, 30
    %v1594 = vshll.u32 %v1593, 30
    %v1595 = vsub.s32 %v1591, %v1594
    %vm1596 = vcmp.lt.s32.totalorder %v1595, 0
    %v1597 = vsub.s32 0, %v1595
    %v1598 = vsel %vm1596, %v1597, %v1595
    %v1599 = vclz %v1598
    %v1600 = vsub.s32 %v1599, 2
    %vm1601 = vcmp.gt.s32.totalorder 0, %v1600
    %v1602 = vsel %vm1601, 0, %v1600
    %v1603 = vsub.s32 32, %v1602
    %v1604 = vshll.u32 %v1595, %v1602
    %v1605 = vshrl.u32 %v1587, %v1603
    %v1606 = vor.u32 %v1604, %v1605
    %v1607 = vsub.s32 4294967266, %v1602
    %v1608 = vadd.s32 %v1607, 127
    %v1609 = vshll.u32 %v1608, 23
    %v1610 = vor.u32 4788187, %v1609
    %v1611 = vand.u32 2147483647, %v1610
    %v1613 = vcvt.s32.f32 %v1606
    %v1614 = vmul.f32 %v1613, %v1611
    %v1615 = vxor.u32 %v1614, 2147483648
    %v1616 = vsel %vm1533, %v1615, %v1614
    %v1617 = vsub.s32 4, %v1593
    %v1618 = vsel %vm1533, %v1617, %v1593
    %v1619 = vsel %vm1532, %v277, %v1616
    %v1620 = vsel %vm1532, 0, %v1618
    %v1621 = vcosq.f32.pop %v1619
    %v1622 = vsinq.f32.pop %v1619
    %vm1623 = vweird.f32 %v277
    %v1624 = vadd.s32 %v1620, 3
    %v1625 = vand.u32 %v1624, 3
    %vm1626 = vcmp.lt.s32.totalorder %v1625, 2
    %vm1627 = vcmp.eq.s32.totalorder %v1625, 0
    %v1628 = vxor.u32 %v1622, 2147483648
    %v1629 = vsel %vm1627, %v1621, %v1628
    %vm1630 = vcmp.eq.s32.totalorder %v1625, 2
    %v1631 = vxor.u32 %v1621, 2147483648
    %v1632 = vsel %vm1630, %v1631, %v1622
    %v1633 = vsel %vm1626, %v1629, %v1632
    %v1634 = vsel %vm1623, nan, %v1633
    %v1635 = vand.u32 2147483647, %v278
    %vm1636 = vcmp.le.f32.partialorder %v1635, 0.7853982
    %vm1637 = vcmp.lt.s32.totalorder %v278, 0
    %v1638 = vand.u32 %v278, 2139095040
    %v1639 = vshrl.u32 %v1638, 23
    %v1640 = vsub.s32 %v1639, 127
    %v1641 = vand.u32 2147483647, %v278
    %v1642 = vand.u32 %v1641, 8388607
    %v1643 = vor.u32 %v1642, 8388608
    %v1644 = vsub.s32 0, %v1643
    %v1645 = vadd.s32 %v1640, 1
    %vm1646 = vcmp.gt.s32.totalorder %v1645, 0
    %v1647 = vsel %vm1646, %v1645, 0
    %v1648 = vshrl.u32 %v1647, 5
    %v1649 = vand.u32 %v1647, 31
    %v1650 = vsub.s32 32, %v1649
    %v1651 = vshrl.u32 683565275, %v1650
    %v1652 = vshll.u32 683565275, %v1649
    %v1653 = vshrl.u32 2475754826, %v1650
    %v1654 = vor.u32 %v1652, %v1653
    %v1655 = vshll.u32 2475754826, %v1649
    %v1656 = vshrl.u32 2131351028, %v1650
    %v1657 = vor.u32 %v1655, %v1656
    %v1658 = vshll.u32 2131351028, %v1649
    %v1659 = vshrl.u32 2102212464, %v1650
    %v1660 = vor.u32 %v1658, %v1659
    %v1661 = vshll.u32 2102212464, %v1649
    %v1662 = vshrl.u32 920167782, %v1650
    %v1663 = vor.u32 %v1661, %v1662
    %v1664 = vshll.u32 920167782, %v1649
    %v1665 = vshrl.u32 1326507024, %v1650
    %v1666 = vor.u32 %v1664, %v1665
    %vm1667 = vcmp.lt.s32.totalorder %v1648, 1
    %vm1668 = vcmp.lt.s32.totalorder %v1648, 2
    %vm1669 = vcmp.lt.s32.totalorder %v1648, 3
    %vm1670 = vcmp.lt.s32.totalorder %v1648, 4
    %v1671 = vsel %vm1667, %v1651, %v1654
    %v1672 = vsel %vm1670, %v1660, 2102212464
    %v1673 = vsel %vm1669, %v1657, %v1672
    %v1674 = vsel %vm1668, %v1671, %v1673
    %v1675 = vsel %vm1667, %v1654, %v1657
    %v1676 = vsel %vm1670, %v1663, 920167782
    %v1677 = vsel %vm1669, %v1660, %v1676
    %v1678 = vsel %vm1668, %v1675, %v1677
    %v1679 = vsel %vm1667, %v1657, %v1660
    %v1680 = vsel %vm1670, %v1666, 1326507024
    %v1681 = vsel %vm1669, %v1663, %v1680
    %v1682 = vsel %vm1668, %v1679, %v1681
    %v1683 = vshll.u32 %v1643, 8
    %v1684 = vmul.u32.u64.compose %v1683, %v1682
    %v1685 = vextract.low.u32 %v1684
    %v1686 = vextract.high.u32 %v1684
    %v1687 = vmul.u32.u64.compose %v1683, %v1678
    %v1688 = vextract.low.u32 %v1687
    %v1689 = vextract.high.u32 %v1687
    %v1690 = vmul.u32 %v1683, %v1674
    %v1691 = vadd.s32 %v1686, %v1688
    %vm1692 = vc.u32 %v1686, %v1688
    %v1693 = vadd.s32 %v1689, 1
    %v1694 = vsel %vm1692, %v1693, %v1689
    %v1695 = vadd.s32 %v1690, %v1694
    %v1696 = vadd.s32 %v1695, 536870912
    %v1697 = vshrl.u32 %v1696, 30
    %v1698 = vshll.u32 %v1697, 30
    %v1699 = vsub.s32 %v1695, %v1698
    %vm1700 = vcmp.lt.s32.totalorder %v1699, 0
    %v1701 = vsub.s32 0, %v1699
    %v1702 = vsel %vm1700, %v1701, %v1699
    %v1703 = vclz %v1702
    %v1704 = vsub.s32 %v1703, 2
    %vm1705 = vcmp.gt.s32.totalorder 0, %v1704
    %v1706 = vsel %vm1705, 0, %v1704
    %v1707 = vsub.s32 32, %v1706
    %v1708 = vshll.u32 %v1699, %v1706
    %v1709 = vshrl.u32 %v1691, %v1707
    %v1710 = vor.u32 %v1708, %v1709
    %v1711 = vsub.s32 4294967266, %v1706
    %v1712 = vadd.s32 %v1711, 127
    %v1713 = vshll.u32 %v1712, 23
    %v1714 = vor.u32 4788187, %v1713
    %v1715 = vand.u32 2147483647, %v1714
    %v1717 = vcvt.s32.f32 %v1710
    %v1718 = vmul.f32 %v1717, %v1715
    %v1719 = vxor.u32 %v1718, 2147483648
    %v1720 = vsel %vm1637, %v1719, %v1718
    %v1721 = vsub.s32 4, %v1697
    %v1722 = vsel %vm1637, %v1721, %v1697
    %v1723 = vsel %vm1636, %v278, %v1720
    %v1724 = vsel %vm1636, 0, %v1722
    %v1725 = vcosq.f32.pop %v1723
    %v1726 = vsinq.f32.pop %v1723
    %vm1727 = vweird.f32 %v278
    %v1728 = vadd.s32 %v1724, 3
    %v1729 = vand.u32 %v1728, 3
    %vm1730 = vcmp.lt.s32.totalorder %v1729, 2
    %vm1731 = vcmp.eq.s32.totalorder %v1729, 0
    %v1732 = vxor.u32 %v1726, 2147483648
    %v1733 = vsel %vm1731, %v1725, %v1732
    %vm1734 = vcmp.eq.s32.totalorder %v1729, 2
    %v1735 = vxor.u32 %v1725, 2147483648
    %v1736 = vsel %vm1734, %v1735, %v1726
    %v1737 = vsel %vm1730, %v1733, %v1736
    %v1738 = vsel %vm1727, nan, %v1737
    %v1739 = vand.u32 2147483647, %v279
    %vm1740 = vcmp.le.f32.partialorder %v1739, 0.7853982
    %vm1741 = vcmp.lt.s32.totalorder %v279, 0
    %v1742 = vand.u32 %v279, 2139095040
    %v1743 = vshrl.u32 %v1742, 23
    %v1744 = vsub.s32 %v1743, 127
    %v1745 = vand.u32 2147483647, %v279
    %v1746 = vand.u32 %v1745, 8388607
    %v1747 = vor.u32 %v1746, 8388608
    %v1748 = vsub.s32 0, %v1747
    %v1749 = vadd.s32 %v1744, 1
    %vm1750 = vcmp.gt.s32.totalorder %v1749, 0
    %v1751 = vsel %vm1750, %v1749, 0
    %v1752 = vshrl.u32 %v1751, 5
    %v1753 = vand.u32 %v1751, 31
    %v1754 = vsub.s32 32, %v1753
    %v1755 = vshrl.u32 683565275, %v1754
    %v1756 = vshll.u32 683565275, %v1753
    %v1757 = vshrl.u32 2475754826, %v1754
    %v1758 = vor.u32 %v1756, %v1757
    %v1759 = vshll.u32 2475754826, %v1753
    %v1760 = vshrl.u32 2131351028, %v1754
    %v1761 = vor.u32 %v1759, %v1760
    %v1762 = vshll.u32 2131351028, %v1753
    %v1763 = vshrl.u32 2102212464, %v1754
    %v1764 = vor.u32 %v1762, %v1763
    %v1765 = vshll.u32 2102212464, %v1753
    %v1766 = vshrl.u32 920167782, %v1754
    %v1767 = vor.u32 %v1765, %v1766
    %v1768 = vshll.u32 920167782, %v1753
    %v1769 = vshrl.u32 1326507024, %v1754
    %v1770 = vor.u32 %v1768, %v1769
    %vm1771 = vcmp.lt.s32.totalorder %v1752, 1
    %vm1772 = vcmp.lt.s32.totalorder %v1752, 2
    %vm1773 = vcmp.lt.s32.totalorder %v1752, 3
    %vm1774 = vcmp.lt.s32.totalorder %v1752, 4
    %v1775 = vsel %vm1771, %v1755, %v1758
    %v1776 = vsel %vm1774, %v1764, 2102212464
    %v1777 = vsel %vm1773, %v1761, %v1776
    %v1778 = vsel %vm1772, %v1775, %v1777
    %v1779 = vsel %vm1771, %v1758, %v1761
    %v1780 = vsel %vm1774, %v1767, 920167782
    %v1781 = vsel %vm1773, %v1764, %v1780
    %v1782 = vsel %vm1772, %v1779, %v1781
    %v1783 = vsel %vm1771, %v1761, %v1764
    %v1784 = vsel %vm1774, %v1770, 1326507024
    %v1785 = vsel %vm1773, %v1767, %v1784
    %v1786 = vsel %vm1772, %v1783, %v1785
    %v1787 = vshll.u32 %v1747, 8
    %v1788 = vmul.u32.u64.compose %v1787, %v1786
    %v1789 = vextract.low.u32 %v1788
    %v1790 = vextract.high.u32 %v1788
    %v1791 = vmul.u32.u64.compose %v1787, %v1782
    %v1792 = vextract.low.u32 %v1791
    %v1793 = vextract.high.u32 %v1791
    %v1794 = vmul.u32 %v1787, %v1778
    %v1795 = vadd.s32 %v1790, %v1792
    %vm1796 = vc.u32 %v1790, %v1792
    %v1797 = vadd.s32 %v1793, 1
    %v1798 = vsel %vm1796, %v1797, %v1793
    %v1799 = vadd.s32 %v1794, %v1798
    %v1800 = vadd.s32 %v1799, 536870912
    %v1801 = vshrl.u32 %v1800, 30
    %v1802 = vshll.u32 %v1801, 30
    %v1803 = vsub.s32 %v1799, %v1802
    %vm1804 = vcmp.lt.s32.totalorder %v1803, 0
    %v1805 = vsub.s32 0, %v1803
    %v1806 = vsel %vm1804, %v1805, %v1803
    %v1807 = vclz %v1806
    %v1808 = vsub.s32 %v1807, 2
    %vm1809 = vcmp.gt.s32.totalorder 0, %v1808
    %v1810 = vsel %vm1809, 0, %v1808
    %v1811 = vsub.s32 32, %v1810
    %v1812 = vshll.u32 %v1803, %v1810
    %v1813 = vshrl.u32 %v1795, %v1811
    %v1814 = vor.u32 %v1812, %v1813
    %v1815 = vsub.s32 4294967266, %v1810
    %v1816 = vadd.s32 %v1815, 127
    %v1817 = vshll.u32 %v1816, 23
    %v1818 = vor.u32 4788187, %v1817
    %v1819 = vand.u32 2147483647, %v1818
    %v1821 = vcvt.s32.f32 %v1814
    %v1822 = vmul.f32 %v1821, %v1819
    %v1823 = vxor.u32 %v1822, 2147483648
    %v1824 = vsel %vm1741, %v1823, %v1822
    %v1825 = vsub.s32 4, %v1801
    %v1826 = vsel %vm1741, %v1825, %v1801
    %v1827 = vsel %vm1740, %v279, %v1824
    %v1828 = vsel %vm1740, 0, %v1826
    %v1829 = vcosq.f32.pop %v1827
    %v1830 = vsinq.f32.pop %v1827
    %vm1831 = vweird.f32 %v279
    %v1832 = vadd.s32 %v1828, 3
    %v1833 = vand.u32 %v1832, 3
    %vm1834 = vcmp.lt.s32.totalorder %v1833, 2
    %vm1835 = vcmp.eq.s32.totalorder %v1833, 0
    %v1836 = vxor.u32 %v1830, 2147483648
    %v1837 = vsel %vm1835, %v1829, %v1836
    %vm1838 = vcmp.eq.s32.totalorder %v1833, 2
    %v1839 = vxor.u32 %v1829, 2147483648
    %v1840 = vsel %vm1838, %v1839, %v1830
    %v1841 = vsel %vm1834, %v1837, %v1840
    %v1842 = vsel %vm1831, nan, %v1841
    %v1843 = vand.u32 2147483647, %v280
    %vm1844 = vcmp.le.f32.partialorder %v1843, 0.7853982
    %vm1845 = vcmp.lt.s32.totalorder %v280, 0
    %v1846 = vand.u32 %v280, 2139095040
    %v1847 = vshrl.u32 %v1846, 23
    %v1848 = vsub.s32 %v1847, 127
    %v1849 = vand.u32 2147483647, %v280
    %v1850 = vand.u32 %v1849, 8388607
    %v1851 = vor.u32 %v1850, 8388608
    %v1852 = vsub.s32 0, %v1851
    %v1853 = vadd.s32 %v1848, 1
    %vm1854 = vcmp.gt.s32.totalorder %v1853, 0
    %v1855 = vsel %vm1854, %v1853, 0
    %v1856 = vshrl.u32 %v1855, 5
    %v1857 = vand.u32 %v1855, 31
    %v1858 = vsub.s32 32, %v1857
    %v1859 = vshrl.u32 683565275, %v1858
    %v1860 = vshll.u32 683565275, %v1857
    %v1861 = vshrl.u32 2475754826, %v1858
    %v1862 = vor.u32 %v1860, %v1861
    %v1863 = vshll.u32 2475754826, %v1857
    %v1864 = vshrl.u32 2131351028, %v1858
    %v1865 = vor.u32 %v1863, %v1864
    %v1866 = vshll.u32 2131351028, %v1857
    %v1867 = vshrl.u32 2102212464, %v1858
    %v1868 = vor.u32 %v1866, %v1867
    %v1869 = vshll.u32 2102212464, %v1857
    %v1870 = vshrl.u32 920167782, %v1858
    %v1871 = vor.u32 %v1869, %v1870
    %v1872 = vshll.u32 920167782, %v1857
    %v1873 = vshrl.u32 1326507024, %v1858
    %v1874 = vor.u32 %v1872, %v1873
    %vm1875 = vcmp.lt.s32.totalorder %v1856, 1
    %vm1876 = vcmp.lt.s32.totalorder %v1856, 2
    %vm1877 = vcmp.lt.s32.totalorder %v1856, 3
    %vm1878 = vcmp.lt.s32.totalorder %v1856, 4
    %v1879 = vsel %vm1875, %v1859, %v1862
    %v1880 = vsel %vm1878, %v1868, 2102212464
    %v1881 = vsel %vm1877, %v1865, %v1880
    %v1882 = vsel %vm1876, %v1879, %v1881
    %v1883 = vsel %vm1875, %v1862, %v1865
    %v1884 = vsel %vm1878, %v1871, 920167782
    %v1885 = vsel %vm1877, %v1868, %v1884
    %v1886 = vsel %vm1876, %v1883, %v1885
    %v1887 = vsel %vm1875, %v1865, %v1868
    %v1888 = vsel %vm1878, %v1874, 1326507024
    %v1889 = vsel %vm1877, %v1871, %v1888
    %v1890 = vsel %vm1876, %v1887, %v1889
    %v1891 = vshll.u32 %v1851, 8
    %v1892 = vmul.u32.u64.compose %v1891, %v1890
    %v1893 = vextract.low.u32 %v1892
    %v1894 = vextract.high.u32 %v1892
    %v1895 = vmul.u32.u64.compose %v1891, %v1886
    %v1896 = vextract.low.u32 %v1895
    %v1897 = vextract.high.u32 %v1895
    %v1898 = vmul.u32 %v1891, %v1882
    %v1899 = vadd.s32 %v1894, %v1896
    %vm1900 = vc.u32 %v1894, %v1896
    %v1901 = vadd.s32 %v1897, 1
    %v1902 = vsel %vm1900, %v1901, %v1897
    %v1903 = vadd.s32 %v1898, %v1902
    %v1904 = vadd.s32 %v1903, 536870912
    %v1905 = vshrl.u32 %v1904, 30
    %v1906 = vshll.u32 %v1905, 30
    %v1907 = vsub.s32 %v1903, %v1906
    %vm1908 = vcmp.lt.s32.totalorder %v1907, 0
    %v1909 = vsub.s32 0, %v1907
    %v1910 = vsel %vm1908, %v1909, %v1907
    %v1911 = vclz %v1910
    %v1912 = vsub.s32 %v1911, 2
    %vm1913 = vcmp.gt.s32.totalorder 0, %v1912
    %v1914 = vsel %vm1913, 0, %v1912
    %v1915 = vsub.s32 32, %v1914
    %v1916 = vshll.u32 %v1907, %v1914
    %v1917 = vshrl.u32 %v1899, %v1915
    %v1918 = vor.u32 %v1916, %v1917
    %v1919 = vsub.s32 4294967266, %v1914
    %v1920 = vadd.s32 %v1919, 127
    %v1921 = vshll.u32 %v1920, 23
    %v1922 = vor.u32 4788187, %v1921
    %v1923 = vand.u32 2147483647, %v1922
    %v1925 = vcvt.s32.f32 %v1918
    %v1926 = vmul.f32 %v1925, %v1923
    %v1927 = vxor.u32 %v1926, 2147483648
    %v1928 = vsel %vm1845, %v1927, %v1926
    %v1929 = vsub.s32 4, %v1905
    %v1930 = vsel %vm1845, %v1929, %v1905
    %v1931 = vsel %vm1844, %v280, %v1928
    %v1932 = vsel %vm1844, 0, %v1930
    %v1933 = vcosq.f32.pop %v1931
    %v1934 = vsinq.f32.pop %v1931
    %vm1935 = vweird.f32 %v280
    %v1936 = vadd.s32 %v1932, 3
    %v1937 = vand.u32 %v1936, 3
    %vm1938 = vcmp.lt.s32.totalorder %v1937, 2
    %vm1939 = vcmp.eq.s32.totalorder %v1937, 0
    %v1940 = vxor.u32 %v1934, 2147483648
    %v1941 = vsel %vm1939, %v1933, %v1940
    %vm1942 = vcmp.eq.s32.totalorder %v1937, 2
    %v1943 = vxor.u32 %v1933, 2147483648
    %v1944 = vsel %vm1942, %v1943, %v1934
    %v1945 = vsel %vm1938, %v1941, %v1944
    %v1946 = vsel %vm1935, nan, %v1945
    %v1947 = vand.u32 2147483647, %v281
    %vm1948 = vcmp.le.f32.partialorder %v1947, 0.7853982
    %vm1949 = vcmp.lt.s32.totalorder %v281, 0
    %v1950 = vand.u32 %v281, 2139095040
    %v1951 = vshrl.u32 %v1950, 23
    %v1952 = vsub.s32 %v1951, 127
    %v1953 = vand.u32 2147483647, %v281
    %v1954 = vand.u32 %v1953, 8388607
    %v1955 = vor.u32 %v1954, 8388608
    %v1956 = vsub.s32 0, %v1955
    %v1957 = vadd.s32 %v1952, 1
    %vm1958 = vcmp.gt.s32.totalorder %v1957, 0
    %v1959 = vsel %vm1958, %v1957, 0
    %v1960 = vshrl.u32 %v1959, 5
    %v1961 = vand.u32 %v1959, 31
    %v1962 = vsub.s32 32, %v1961
    %v1963 = vshrl.u32 683565275, %v1962
    %v1964 = vshll.u32 683565275, %v1961
    %v1965 = vshrl.u32 2475754826, %v1962
    %v1966 = vor.u32 %v1964, %v1965
    %v1967 = vshll.u32 2475754826, %v1961
    %v1968 = vshrl.u32 2131351028, %v1962
    %v1969 = vor.u32 %v1967, %v1968
    %v1970 = vshll.u32 2131351028, %v1961
    %v1971 = vshrl.u32 2102212464, %v1962
    %v1972 = vor.u32 %v1970, %v1971
    %v1973 = vshll.u32 2102212464, %v1961
    %v1974 = vshrl.u32 920167782, %v1962
    %v1975 = vor.u32 %v1973, %v1974
    %v1976 = vshll.u32 920167782, %v1961
    %v1977 = vshrl.u32 1326507024, %v1962
    %v1978 = vor.u32 %v1976, %v1977
    %vm1979 = vcmp.lt.s32.totalorder %v1960, 1
    %vm1980 = vcmp.lt.s32.totalorder %v1960, 2
    %vm1981 = vcmp.lt.s32.totalorder %v1960, 3
    %vm1982 = vcmp.lt.s32.totalorder %v1960, 4
    %v1983 = vsel %vm1979, %v1963, %v1966
    %v1984 = vsel %vm1982, %v1972, 2102212464
    %v1985 = vsel %vm1981, %v1969, %v1984
    %v1986 = vsel %vm1980, %v1983, %v1985
    %v1987 = vsel %vm1979, %v1966, %v1969
    %v1988 = vsel %vm1982, %v1975, 920167782
    %v1989 = vsel %vm1981, %v1972, %v1988
    %v1990 = vsel %vm1980, %v1987, %v1989
    %v1991 = vsel %vm1979, %v1969, %v1972
    %v1992 = vsel %vm1982, %v1978, 1326507024
    %v1993 = vsel %vm1981, %v1975, %v1992
    %v1994 = vsel %vm1980, %v1991, %v1993
    %v1995 = vshll.u32 %v1955, 8
    %v1996 = vmul.u32.u64.compose %v1995, %v1994
    %v1997 = vextract.low.u32 %v1996
    %v1998 = vextract.high.u32 %v1996
    %v1999 = vmul.u32.u64.compose %v1995, %v1990
    %v2000 = vextract.low.u32 %v1999
    %v2001 = vextract.high.u32 %v1999
    %v2002 = vmul.u32 %v1995, %v1986
    %v2003 = vadd.s32 %v1998, %v2000
    %vm2004 = vc.u32 %v1998, %v2000
    %v2005 = vadd.s32 %v2001, 1
    %v2006 = vsel %vm2004, %v2005, %v2001
    %v2007 = vadd.s32 %v2002, %v2006
    %v2008 = vadd.s32 %v2007, 536870912
    %v2009 = vshrl.u32 %v2008, 30
    %v2010 = vshll.u32 %v2009, 30
    %v2011 = vsub.s32 %v2007, %v2010
    %vm2012 = vcmp.lt.s32.totalorder %v2011, 0
    %v2013 = vsub.s32 0, %v2011
    %v2014 = vsel %vm2012, %v2013, %v2011
    %v2015 = vclz %v2014
    %v2016 = vsub.s32 %v2015, 2
    %vm2017 = vcmp.gt.s32.totalorder 0, %v2016
    %v2018 = vsel %vm2017, 0, %v2016
    %v2019 = vsub.s32 32, %v2018
    %v2020 = vshll.u32 %v2011, %v2018
    %v2021 = vshrl.u32 %v2003, %v2019
    %v2022 = vor.u32 %v2020, %v2021
    %v2023 = vsub.s32 4294967266, %v2018
    %v2024 = vadd.s32 %v2023, 127
    %v2025 = vshll.u32 %v2024, 23
    %v2026 = vor.u32 4788187, %v2025
    %v2027 = vand.u32 2147483647, %v2026
    %v2029 = vcvt.s32.f32 %v2022
    %v2030 = vmul.f32 %v2029, %v2027
    %v2031 = vxor.u32 %v2030, 2147483648
    %v2032 = vsel %vm1949, %v2031, %v2030
    %v2033 = vsub.s32 4, %v2009
    %v2034 = vsel %vm1949, %v2033, %v2009
    %v2035 = vsel %vm1948, %v281, %v2032
    %v2036 = vsel %vm1948, 0, %v2034
    %v2037 = vcosq.f32.pop %v2035
    %v2038 = vsinq.f32.pop %v2035
    %vm2039 = vweird.f32 %v281
    %v2040 = vadd.s32 %v2036, 3
    %v2041 = vand.u32 %v2040, 3
    %vm2042 = vcmp.lt.s32.totalorder %v2041, 2
    %vm2043 = vcmp.eq.s32.totalorder %v2041, 0
    %v2044 = vxor.u32 %v2038, 2147483648
    %v2045 = vsel %vm2043, %v2037, %v2044
    %vm2046 = vcmp.eq.s32.totalorder %v2041, 2
    %v2047 = vxor.u32 %v2037, 2147483648
    %v2048 = vsel %vm2046, %v2047, %v2038
    %v2049 = vsel %vm2042, %v2045, %v2048
    %v2050 = vsel %vm2039, nan, %v2049
    %v2051 = vand.u32 2147483647, %v282
    %vm2052 = vcmp.le.f32.partialorder %v2051, 0.7853982
    %vm2053 = vcmp.lt.s32.totalorder %v282, 0
    %v2054 = vand.u32 %v282, 2139095040
    %v2055 = vshrl.u32 %v2054, 23
    %v2056 = vsub.s32 %v2055, 127
    %v2057 = vand.u32 2147483647, %v282
    %v2058 = vand.u32 %v2057, 8388607
    %v2059 = vor.u32 %v2058, 8388608
    %v2060 = vsub.s32 0, %v2059
    %v2061 = vadd.s32 %v2056, 1
    %vm2062 = vcmp.gt.s32.totalorder %v2061, 0
    %v2063 = vsel %vm2062, %v2061, 0
    %v2064 = vshrl.u32 %v2063, 5
    %v2065 = vand.u32 %v2063, 31
    %v2066 = vsub.s32 32, %v2065
    %v2067 = vshrl.u32 683565275, %v2066
    %v2068 = vshll.u32 683565275, %v2065
    %v2069 = vshrl.u32 2475754826, %v2066
    %v2070 = vor.u32 %v2068, %v2069
    %v2071 = vshll.u32 2475754826, %v2065
    %v2072 = vshrl.u32 2131351028, %v2066
    %v2073 = vor.u32 %v2071, %v2072
    %v2074 = vshll.u32 2131351028, %v2065
    %v2075 = vshrl.u32 2102212464, %v2066
    %v2076 = vor.u32 %v2074, %v2075
    %v2077 = vshll.u32 2102212464, %v2065
    %v2078 = vshrl.u32 920167782, %v2066
    %v2079 = vor.u32 %v2077, %v2078
    %v2080 = vshll.u32 920167782, %v2065
    %v2081 = vshrl.u32 1326507024, %v2066
    %v2082 = vor.u32 %v2080, %v2081
    %vm2083 = vcmp.lt.s32.totalorder %v2064, 1
    %vm2084 = vcmp.lt.s32.totalorder %v2064, 2
    %vm2085 = vcmp.lt.s32.totalorder %v2064, 3
    %vm2086 = vcmp.lt.s32.totalorder %v2064, 4
    %v2087 = vsel %vm2083, %v2067, %v2070
    %v2088 = vsel %vm2086, %v2076, 2102212464
    %v2089 = vsel %vm2085, %v2073, %v2088
    %v2090 = vsel %vm2084, %v2087, %v2089
    %v2091 = vsel %vm2083, %v2070, %v2073
    %v2092 = vsel %vm2086, %v2079, 920167782
    %v2093 = vsel %vm2085, %v2076, %v2092
    %v2094 = vsel %vm2084, %v2091, %v2093
    %v2095 = vsel %vm2083, %v2073, %v2076
    %v2096 = vsel %vm2086, %v2082, 1326507024
    %v2097 = vsel %vm2085, %v2079, %v2096
    %v2098 = vsel %vm2084, %v2095, %v2097
    %v2099 = vshll.u32 %v2059, 8
    %v2100 = vmul.u32.u64.compose %v2099, %v2098
    %v2101 = vextract.low.u32 %v2100
    %v2102 = vextract.high.u32 %v2100
    %v2103 = vmul.u32.u64.compose %v2099, %v2094
    %v2104 = vextract.low.u32 %v2103
    %v2105 = vextract.high.u32 %v2103
    %v2106 = vmul.u32 %v2099, %v2090
    %v2107 = vadd.s32 %v2102, %v2104
    %vm2108 = vc.u32 %v2102, %v2104
    %v2109 = vadd.s32 %v2105, 1
    %v2110 = vsel %vm2108, %v2109, %v2105
    %v2111 = vadd.s32 %v2106, %v2110
    %v2112 = vadd.s32 %v2111, 536870912
    %v2113 = vshrl.u32 %v2112, 30
    %v2114 = vshll.u32 %v2113, 30
    %v2115 = vsub.s32 %v2111, %v2114
    %vm2116 = vcmp.lt.s32.totalorder %v2115, 0
    %v2117 = vsub.s32 0, %v2115
    %v2118 = vsel %vm2116, %v2117, %v2115
    %v2119 = vclz %v2118
    %v2120 = vsub.s32 %v2119, 2
    %vm2121 = vcmp.gt.s32.totalorder 0, %v2120
    %v2122 = vsel %vm2121, 0, %v2120
    %v2123 = vsub.s32 32, %v2122
    %v2124 = vshll.u32 %v2115, %v2122
    %v2125 = vshrl.u32 %v2107, %v2123
    %v2126 = vor.u32 %v2124, %v2125
    %v2127 = vsub.s32 4294967266, %v2122
    %v2128 = vadd.s32 %v2127, 127
    %v2129 = vshll.u32 %v2128, 23
    %v2130 = vor.u32 4788187, %v2129
    %v2131 = vand.u32 2147483647, %v2130
    %v2133 = vcvt.s32.f32 %v2126
    %v2134 = vmul.f32 %v2133, %v2131
    %v2135 = vxor.u32 %v2134, 2147483648
    %v2136 = vsel %vm2053, %v2135, %v2134
    %v2137 = vsub.s32 4, %v2113
    %v2138 = vsel %vm2053, %v2137, %v2113
    %v2139 = vsel %vm2052, %v282, %v2136
    %v2140 = vsel %vm2052, 0, %v2138
    %v2141 = vcosq.f32.pop %v2139
    %v2142 = vsinq.f32.pop %v2139
    %vm2143 = vweird.f32 %v282
    %v2144 = vadd.s32 %v2140, 3
    %v2145 = vand.u32 %v2144, 3
    %vm2146 = vcmp.lt.s32.totalorder %v2145, 2
    %vm2147 = vcmp.eq.s32.totalorder %v2145, 0
    %v2148 = vxor.u32 %v2142, 2147483648
    %v2149 = vsel %vm2147, %v2141, %v2148
    %vm2150 = vcmp.eq.s32.totalorder %v2145, 2
    %v2151 = vxor.u32 %v2141, 2147483648
    %v2152 = vsel %vm2150, %v2151, %v2142
    %v2153 = vsel %vm2146, %v2149, %v2152
    %v2154 = vsel %vm2143, nan, %v2153
    %2155 = vst [vmem:[#allocation2] sm:$0xff] %v386
    %2156 = vst [vmem:[#allocation2 + $0x8] sm:$0xff] %v490
    %2157 = vst [vmem:[#allocation2 + $0x10] sm:$0xff] %v594
    %2158 = vst [vmem:[#allocation2 + $0x18] sm:$0xff] %v698
    %2159 = vst [vmem:[#allocation2 + $0x20] sm:$0xff] %v802
    %2160 = vst [vmem:[#allocation2 + $0x28] sm:$0xff] %v906
    %2161 = vst [vmem:[#allocation2 + $0x30] sm:$0xff] %v1010
    %2162 = vst [vmem:[#allocation2 + $0x38] sm:$0xff] %v1114
    %2163 = vst [vmem:[#allocation2 + $0x40] sm:$0xff] %v1218
    %2164 = vst [vmem:[#allocation2 + $0x48] sm:$0xff] %v1322
    %2165 = vst [vmem:[#allocation2 + $0x50] sm:$0xff] %v1426
    %2166 = vst [vmem:[#allocation2 + $0x58] sm:$0xff] %v1530
    %2167 = vst [vmem:[#allocation2 + $0x60] sm:$0xff] %v1634
    %2168 = vst [vmem:[#allocation2 + $0x68] sm:$0xff] %v1738
    %2169 = vst [vmem:[#allocation2 + $0x70] sm:$0xff] %v1842
    %2170 = vst [vmem:[#allocation2 + $0x78] sm:$0xff] %v1946
    %2171 = vst [vmem:[#allocation2 + $0x80] sm:$0xff] %v2050
    %2172 = vst [vmem:[#allocation2 + $0x88] sm:$0xff] %v2154
    // Predicated region
    $region14: #{tpu_custom_call.1} parent=1 // pred_check
      _
    $region15: #{tpu_custom_call.1} parent=1 // pred_check_branch
      %2174 = sbr.rel (0) target = $region17
    $region16: #{tpu_custom_call.1} parent=1 // pred_region
      %s2176 = ssub.s32 2304, 2176
      %2177 = vsyncadd [#allocation3], %s2176
      %s2178 = sshll.u32 [#allocation2], 4
      %s2179 = int_to_ptr.vmem [resolvable:$true] %s2178
      %2184 = dma.vmem_to_hbm [thread:$0]  %s2179, 2176, %s3, [#allocation3], 128, 128, 8
    $region17: #{tpu_custom_call.1} parent=1 // pred_fallthru
      _
    // Predicated region
    $region18: #{tpu_custom_call.1} parent=1 // pred_check
      _
    $region19: #{tpu_custom_call.1} parent=1 // pred_check_branch
      %2186 = sbr.rel (0) target = $region21
    $region20: #{tpu_custom_call.1} parent=1 // pred_region
      %2187 = dma.done [#allocation3], 2304
    $region21: #{tpu_custom_call.1} parent=1 // pred_fallthru
      _
    %2188 = vsyncpa [#allocation3], 1

</llo_original>
